<compile_context>
chip_gen: v7x
topology: tpu7x:2x2x1
jax: 0.10.0
libtpu: 0.0.40
codegen_flags: <defaults>
</compile_context>

<pallas_src>
import jax
import jax.numpy as jnp
from jax.experimental import pallas as pl
from jax.experimental.pallas import tpu as pltpu


def _round_up(n, m):
    return ((n + m - 1) // m) * m


# ----------------------------------------------------------------------------
# Kernel
# ----------------------------------------------------------------------------
def vae_kernel(x_ref, eps_ref,
               w1_ref, b1_ref,        # img2hid           (in_pad, h_pad)
               w23_ref, b23_ref,      # hid2mu||hid2sigma (h_pad, 2*z_pad)
               w4_ref, b4_ref,        # z2hid             (z_pad, h_pad)
               w5_ref, b5_ref,        # hid2img           (h_pad, in_pad)
               xrec_ref, musig_ref):
    x = x_ref[...]            # bf16, pre-cast in the wrapper
    eps = eps_ref[...]        # bf16

    # ---- encoder ----
    h = jnp.dot(x, w1_ref[...], preferred_element_type=jnp.float32) + b1_ref[...]
    h = jnp.maximum(h, 0.0)                                    # ReLU (f32)

    # fused mu/sigma matmul: one lane-dense (TB, 2*z_pad) result
    musig = jnp.dot(h.astype(jnp.bfloat16), w23_ref[...],
                    preferred_element_type=jnp.float32) + b23_ref[...]
    z_pad = musig_ref.shape[1] // 2
    mu = musig[:, :z_pad]
    sigma = musig[:, z_pad:]

    # reparametrization with uniform noise (matches torch.rand_like)
    z = mu + sigma * eps.astype(jnp.float32)

    # ---- decoder ----
    hd = jnp.dot(z.astype(jnp.bfloat16), w4_ref[...],
                 preferred_element_type=jnp.float32) + b4_ref[...]
    hd = jnp.maximum(hd, 0.0)                                  # ReLU (f32)
    logits = jnp.dot(hd.astype(jnp.bfloat16), w5_ref[...],
                     preferred_element_type=jnp.float32) + b5_ref[...]

    # sigmoid = 1 / (1 + exp(-x)) : exp and reciprocal both on the EUP slot
    e = jnp.exp(-logits)
    xrec = pl.reciprocal(1.0 + e, approx=True)

    xrec_ref[...] = xrec.astype(xrec_ref.dtype)   # bf16 output stream
    musig_ref[...] = musig                         # f32 mu||sigma slab


# ----------------------------------------------------------------------------
# One-time weight preparation (hoisted out of the per-call wrapper)
# ----------------------------------------------------------------------------
def prepare_params(params):
    """Pad to lane-aligned shapes, fuse hid2mu||hid2sigma, cast to bf16.

    Call once; reuse the result for every forward call.
    Weights are expected stored transposed, i.e. (in_features, out_features).
    """
    w1, b1 = params["img2hid"]
    w2, b2 = params["hid2mu"]
    w3, b3 = params["hid2sigma"]
    w4, b4 = params["z2hid"]
    w5, b5 = params["hid2img"]

    input_dim, h_dim = w1.shape
    z_dim = w2.shape[1]
    in_pad = _round_up(input_dim, 128)
    h_pad = _round_up(h_dim, 128)
    z_pad = _round_up(z_dim, 128)

    def pad_w(w, rows, cols):
        w = jnp.pad(w, ((0, rows - w.shape[0]), (0, cols - w.shape[1])))
        return w.astype(jnp.bfloat16)

    def pad_b(b, cols):
        b = b.reshape(1, -1)
        return jnp.pad(b, ((0, 0), (0, cols - b.shape[1]))).astype(jnp.float32)

    prep = {
        "w1": pad_w(w1, in_pad, h_pad),
        "b1": pad_b(b1, h_pad),
        "w23": jnp.concatenate([pad_w(w2, h_pad, z_pad), pad_w(w3, h_pad, z_pad)], axis=1),
        "b23": jnp.concatenate([pad_b(b2, z_pad), pad_b(b3, z_pad)], axis=1),
        "w4": pad_w(w4, z_pad, h_pad),
        "b4": pad_b(b4, h_pad),
        "w5": pad_w(w5, h_pad, in_pad),
        "b5": pad_b(b5, in_pad),
    }
    return jax.tree_util.tree_map(jnp.asarray, prep)


def _choose_tile(B):
    """Batch tile: big enough to amortize per-step overhead, but >=2 grid steps
    once the batch allows it (so v7x's two TensorCores both get work)."""
    B16 = _round_up(B, 16)          # bf16 native sublane pack is 16 rows
    if B16 <= 128:
        return B16, B16             # tiny batch: single small step
    tb = min(512, _round_up((B16 + 1) // 2, 128))
    return tb, _round_up(B16, tb)


# ----------------------------------------------------------------------------
# Forward wrapper
# ----------------------------------------------------------------------------
@jax.jit
def vae_forward(x, eps, prep):
    """x: (B, input_dim) f32, eps: (B, z_dim) f32, prep: prepare_params() output.

    Returns (x_reconstructed [bf16], mu [f32], sigma [f32]) at original shapes.
    """
    B, input_dim = x.shape
    z_dim = eps.shape[1]

    in_pad, h_pad = prep["w1"].shape
    z_pad = prep["w23"].shape[1] // 2

    TB, B_pad = _choose_tile(B)

    # Activation streams in bf16 (halves HBM bytes for the widest streams).
    xp = jnp.pad(x, ((0, B_pad - B), (0, in_pad - input_dim))).astype(jnp.bfloat16)
    epsp = jnp.pad(eps, ((0, B_pad - B), (0, z_pad - z_dim))).astype(jnp.bfloat16)

    flat_inputs = (xp, epsp,
                   prep["w1"], prep["b1"], prep["w23"], prep["b23"],
                   prep["w4"], prep["b4"], prep["w5"], prep["b5"])

    # x/eps/outputs move with the batch grid step; weights/biases use a constant
    # index_map so they stay VMEM-resident across steps (no re-DMA).
    const = lambda i: (0, 0)
    batch = lambda i: (i, 0)
    in_specs = [
        pl.BlockSpec((TB, in_pad), batch),          # x (bf16)
        pl.BlockSpec((TB, z_pad), batch),           # eps (bf16)
        pl.BlockSpec((in_pad, h_pad), const),       # w1
        pl.BlockSpec((1, h_pad), const),            # b1
        pl.BlockSpec((h_pad, 2 * z_pad), const),    # w2||w3
        pl.BlockSpec((1, 2 * z_pad), const),        # b2||b3
        pl.BlockSpec((z_pad, h_pad), const),        # w4
        pl.BlockSpec((1, h_pad), const),            # b4
        pl.BlockSpec((h_pad, in_pad), const),       # w5
        pl.BlockSpec((1, in_pad), const),           # b5
    ]
    out_specs = (
        pl.BlockSpec((TB, in_pad), batch),          # x_reconstructed (bf16, padded)
        pl.BlockSpec((TB, 2 * z_pad), batch),       # mu||sigma slab (f32, padded)
    )
    out_shapes = (
        jax.ShapeDtypeStruct((B_pad, in_pad), jnp.bfloat16),
        jax.ShapeDtypeStruct((B_pad, 2 * z_pad), jnp.float32),
    )

    grid_spec = pltpu.PrefetchScalarGridSpec(
        num_scalar_prefetch=0,
        grid=(B_pad // TB,),
        in_specs=in_specs,
        out_specs=out_specs,
    )

    # Advisory cost estimate so XLA schedules the surrounding pads/slices well.
    flops = 2 * B_pad * (in_pad * h_pad + h_pad * 2 * z_pad
                         + z_pad * h_pad + h_pad * in_pad)
    weight_bytes = sum(int(v.size) * v.dtype.itemsize for v in prep.values())
    bytes_accessed = (B_pad * in_pad * 2      # x in (bf16)
                      + B_pad * z_pad * 2     # eps in (bf16)
                      + weight_bytes          # weights
                      + B_pad * in_pad * 2    # xrec out (bf16)
                      + B_pad * 2 * z_pad * 4)  # mu||sigma out (f32)
    cost = pl.CostEstimate(flops=flops,
                           transcendentals=B_pad * in_pad,   # exp in sigmoid
                           bytes_accessed=bytes_accessed)

    xrec_p, musig_p = pl.pallas_call(
        vae_kernel,
        out_shape=out_shapes,
        grid_spec=grid_spec,
        compiler_params=pltpu.CompilerParams(
            dimension_semantics=("parallel",),
            vmem_limit_bytes=32 * 1024 * 1024),   # headroom for TB=512 on v5e's
        cost_estimate=cost,                        # 16 MiB default scoped VMEM
    )(*flat_inputs)

    x_rec = xrec_p[:B, :input_dim]                 # bf16
    mu = musig_p[:B, :z_dim]                       # f32
    sigma = musig_p[:B, z_pad:z_pad + z_dim]       # f32
    return x_rec, mu, sigma


# ----------------------------------------------------------------------------
# Synthetic params + pure-JAX reference
# ----------------------------------------------------------------------------
def init_params(key, input_dim, h_dim, z_dim):
    """Deterministic synthetic params. Weights stored as (in, out), f32."""
    def linear(k, fan_in, fan_out):
        kw, kb = jax.random.split(k)
        bound = 1.0 / jnp.sqrt(fan_in)
        w = jax.random.uniform(kw, (fan_in, fan_out), jnp.float32, -bound, bound)
        b = jax.random.uniform(kb, (fan_out,), jnp.float32, -bound, bound)
        return w, b

    keys = jax.random.split(key, 5)
    return {
        "img2hid":   linear(keys[0], input_dim, h_dim),
        "hid2mu":    linear(keys[1], h_dim, z_dim),
        "hid2sigma": linear(keys[2], h_dim, z_dim),
        "z2hid":     linear(keys[3], z_dim, h_dim),
        "hid2img":   linear(keys[4], h_dim, input_dim),
    }


def vae_reference(x, eps, params):
    """Pure-JAX reference using the same bf16-matmul / f32-accumulate recipe."""
    def lin(name, v):
        w, b = params[name]
        return jnp.dot(v.astype(jnp.bfloat16), w.astype(jnp.bfloat16),
                       preferred_element_type=jnp.float32) + b

    h = jax.nn.relu(lin("img2hid", x))
    mu = lin("hid2mu", h)
    sigma = lin("hid2sigma", h)
    # mirror the kernel's bf16 eps stream
    z = mu + sigma * eps.astype(jnp.bfloat16).astype(jnp.float32)
    hd = jax.nn.relu(lin("z2hid", z))
    return jax.nn.sigmoid(lin("hid2img", hd)), mu, sigma


if __name__ == "__main__":
    # Small shapes consistent with the module defaults (h_dim=200, z_dim=20);
    # input_dim=784 mirrors the flattened-MNIST use case of this VAE.
    B, INPUT_DIM, H_DIM, Z_DIM = 8, 784, 200, 20

    key = jax.random.PRNGKey(0)
    k_params, k_x, k_eps = jax.random.split(key, 3)

    params = init_params(k_params, INPUT_DIM, H_DIM, Z_DIM)
    x = jax.random.uniform(k_x, (B, INPUT_DIM), jnp.float32)     # "image" in [0,1)
    eps = jax.random.uniform(k_eps, (B, Z_DIM), jnp.float32)     # torch.rand_like

    # one-time weight preparation (padding / fusion / bf16), reused across calls
    prep = prepare_params(params)

    x_rec, mu, sigma = vae_forward(x, eps, prep)
    jax.block_until_ready((x_rec, mu, sigma))

    # sanity-check against pure-JAX reference (same bf16 matmul recipe)
    x_rec_ref, mu_ref, sigma_ref = vae_reference(x, eps, params)
    assert x_rec.shape == (B, INPUT_DIM) and mu.shape == (B, Z_DIM) and sigma.shape == (B, Z_DIM)
    # x_rec is bf16 + approx-reciprocal sigmoid -> looser tolerance; mu/sigma are f32
    assert jnp.allclose(x_rec.astype(jnp.float32), x_rec_ref, atol=1e-2, rtol=1e-2)
    assert jnp.allclose(mu, mu_ref, atol=2e-3, rtol=2e-3)
    assert jnp.allclose(sigma, sigma_ref, atol=2e-3, rtol=2e-3)

    print("KERNEL_OK")
</pallas_src>

<mosaic_0001>
module attributes {stable_mosaic.version = 11 : i64} {
  func.func @vae_kernel(%arg0: i32, %arg1: memref<16x896xbf16, #tpu.memory_space<vmem>>, %arg2: memref<16x128xbf16, #tpu.memory_space<vmem>>, %arg3: memref<896x256xbf16, #tpu.memory_space<vmem>>, %arg4: memref<1x256xf32, #tpu.memory_space<vmem>>, %arg5: memref<256x256xbf16, #tpu.memory_space<vmem>>, %arg6: memref<1x256xf32, #tpu.memory_space<vmem>>, %arg7: memref<128x256xbf16, #tpu.memory_space<vmem>>, %arg8: memref<1x256xf32, #tpu.memory_space<vmem>>, %arg9: memref<256x896xbf16, #tpu.memory_space<vmem>>, %arg10: memref<1x896xf32, #tpu.memory_space<vmem>>, %arg11: memref<16x896xbf16, #tpu.memory_space<vmem>>, %arg12: memref<16x256xf32, #tpu.memory_space<vmem>>) attributes {dimension_semantics = [#tpu.dimension_semantics<parallel>], iteration_bounds = array<i64: 1>, scalar_prefetch = 0 : i64, scratch_operands = 0 : i64, tpu.core_type = #tpu.core_type<tc>, window_params = [{transform_indices = @transform_0, window_bounds = array<i64: 16, 896>}, {transform_indices = @transform_1, window_bounds = array<i64: 16, 128>}, {pipeline_mode = #tpu.pipeline_mode<synchronous>, transform_indices = @transform_2, window_bounds = array<i64: 896, 256>}, {pipeline_mode = #tpu.pipeline_mode<synchronous>, transform_indices = @transform_3, window_bounds = array<i64: 1, 256>}, {pipeline_mode = #tpu.pipeline_mode<synchronous>, transform_indices = @transform_4, window_bounds = array<i64: 256, 256>}, {pipeline_mode = #tpu.pipeline_mode<synchronous>, transform_indices = @transform_5, window_bounds = array<i64: 1, 256>}, {pipeline_mode = #tpu.pipeline_mode<synchronous>, transform_indices = @transform_6, window_bounds = array<i64: 128, 256>}, {pipeline_mode = #tpu.pipeline_mode<synchronous>, transform_indices = @transform_7, window_bounds = array<i64: 1, 256>}, {pipeline_mode = #tpu.pipeline_mode<synchronous>, transform_indices = @transform_8, window_bounds = array<i64: 256, 896>}, {pipeline_mode = #tpu.pipeline_mode<synchronous>, transform_indices = @transform_9, window_bounds = array<i64: 1, 896>}, {transform_indices = @transform_10, window_bounds = array<i64: 16, 896>}, {transform_indices = @transform_11, window_bounds = array<i64: 16, 256>}]} {
    %c0 = arith.constant 0 : index
    %c0_0 = arith.constant 0 : index
    %0 = vector.load %arg1[%c0, %c0_0] : memref<16x896xbf16, #tpu.memory_space<vmem>>, vector<16x896xbf16>
    %c0_1 = arith.constant 0 : index
    %c0_2 = arith.constant 0 : index
    %1 = vector.load %arg2[%c0_1, %c0_2] : memref<16x128xbf16, #tpu.memory_space<vmem>>, vector<16x128xbf16>
    %c0_3 = arith.constant 0 : index
    %c0_4 = arith.constant 0 : index
    %2 = vector.load %arg3[%c0_3, %c0_4] : memref<896x256xbf16, #tpu.memory_space<vmem>>, vector<896x256xbf16>
    %cst = arith.constant dense<0.000000e+00> : vector<16x256xf32>
    %3 = tpu.matmul %0, %2, %cst {dimension_numbers = #tpu.dot_dimension_numbers<[1], [0], [0], [1], [0, 0, 1, 1], [], []>} : vector<16x896xbf16>, vector<896x256xbf16>, vector<16x256xf32> -> vector<16x256xf32>
    %c0_5 = arith.constant 0 : index
    %c0_6 = arith.constant 0 : index
    %4 = vector.load %arg4[%c0_5, %c0_6] : memref<1x256xf32, #tpu.memory_space<vmem>>, vector<1x256xf32>
    %5 = vector.broadcast %4 : vector<1x256xf32> to vector<16x256xf32>
    %6 = arith.addf %3, %5 : vector<16x256xf32>
    %cst_7 = arith.constant 0.000000e+00 : f32
    %7 = vector.broadcast %cst_7 : f32 to vector<16x256xf32>
    %8 = arith.maximumf %6, %7 : vector<16x256xf32>
    %9 = arith.truncf %8 : vector<16x256xf32> to vector<16x256xbf16>
    %c0_8 = arith.constant 0 : index
    %c0_9 = arith.constant 0 : index
    %10 = vector.load %arg5[%c0_8, %c0_9] : memref<256x256xbf16, #tpu.memory_space<vmem>>, vector<256x256xbf16>
    %cst_10 = arith.constant dense<0.000000e+00> : vector<16x256xf32>
    %11 = tpu.matmul %9, %10, %cst_10 {dimension_numbers = #tpu.dot_dimension_numbers<[1], [0], [0], [1], [0, 0, 1, 1], [], []>} : vector<16x256xbf16>, vector<256x256xbf16>, vector<16x256xf32> -> vector<16x256xf32>
    %c0_11 = arith.constant 0 : index
    %c0_12 = arith.constant 0 : index
    %12 = vector.load %arg6[%c0_11, %c0_12] : memref<1x256xf32, #tpu.memory_space<vmem>>, vector<1x256xf32>
    %13 = vector.broadcast %12 : vector<1x256xf32> to vector<16x256xf32>
    %14 = arith.addf %11, %13 : vector<16x256xf32>
    %15 = vector.extract_strided_slice %14 {offsets = [0, 0], sizes = [16, 128], strides = [1, 1]} : vector<16x256xf32> to vector<16x128xf32>
    %16 = vector.extract_strided_slice %14 {offsets = [0, 128], sizes = [16, 128], strides = [1, 1]} : vector<16x256xf32> to vector<16x128xf32>
    %17 = arith.extf %1 : vector<16x128xbf16> to vector<16x128xf32>
    %18 = arith.mulf %16, %17 : vector<16x128xf32>
    %19 = arith.addf %15, %18 : vector<16x128xf32>
    %20 = arith.truncf %19 : vector<16x128xf32> to vector<16x128xbf16>
    %c0_13 = arith.constant 0 : index
    %c0_14 = arith.constant 0 : index
    %21 = vector.load %arg7[%c0_13, %c0_14] : memref<128x256xbf16, #tpu.memory_space<vmem>>, vector<128x256xbf16>
    %cst_15 = arith.constant dense<0.000000e+00> : vector<16x256xf32>
    %22 = tpu.matmul %20, %21, %cst_15 {dimension_numbers = #tpu.dot_dimension_numbers<[1], [0], [0], [1], [0, 0, 1, 1], [], []>} : vector<16x128xbf16>, vector<128x256xbf16>, vector<16x256xf32> -> vector<16x256xf32>
    %c0_16 = arith.constant 0 : index
    %c0_17 = arith.constant 0 : index
    %23 = vector.load %arg8[%c0_16, %c0_17] : memref<1x256xf32, #tpu.memory_space<vmem>>, vector<1x256xf32>
    %24 = vector.broadcast %23 : vector<1x256xf32> to vector<16x256xf32>
    %25 = arith.addf %22, %24 : vector<16x256xf32>
    %cst_18 = arith.constant 0.000000e+00 : f32
    %26 = vector.broadcast %cst_18 : f32 to vector<16x256xf32>
    %27 = arith.maximumf %25, %26 : vector<16x256xf32>
    %28 = arith.truncf %27 : vector<16x256xf32> to vector<16x256xbf16>
    %c0_19 = arith.constant 0 : index
    %c0_20 = arith.constant 0 : index
    %29 = vector.load %arg9[%c0_19, %c0_20] : memref<256x896xbf16, #tpu.memory_space<vmem>>, vector<256x896xbf16>
    %cst_21 = arith.constant dense<0.000000e+00> : vector<16x896xf32>
    %30 = tpu.matmul %28, %29, %cst_21 {dimension_numbers = #tpu.dot_dimension_numbers<[1], [0], [0], [1], [0, 0, 1, 1], [], []>} : vector<16x256xbf16>, vector<256x896xbf16>, vector<16x896xf32> -> vector<16x896xf32>
    %c0_22 = arith.constant 0 : index
    %c0_23 = arith.constant 0 : index
    %31 = vector.load %arg10[%c0_22, %c0_23] : memref<1x896xf32, #tpu.memory_space<vmem>>, vector<1x896xf32>
    %32 = vector.broadcast %31 : vector<1x896xf32> to vector<16x896xf32>
    %33 = arith.addf %30, %32 : vector<16x896xf32>
    %cst_24 = arith.constant 0.000000e+00 : f32
    %34 = vector.broadcast %cst_24 : f32 to vector<16x896xf32>
    %35 = arith.subf %34, %33 : vector<16x896xf32>
    %36 = math.exp %35 : vector<16x896xf32>
    %cst_25 = arith.constant 1.000000e+00 : f32
    %37 = vector.broadcast %cst_25 : f32 to vector<16x896xf32>
    %38 = arith.addf %37, %36 : vector<16x896xf32>
    %39 = tpu.reciprocal %38 {approx = true} : vector<16x896xf32> -> vector<16x896xf32>
    %40 = arith.truncf %39 : vector<16x896xf32> to vector<16x896xbf16>
    %c0_26 = arith.constant 0 : index
    %c0_27 = arith.constant 0 : index
    %41 = vector.load %arg11[%c0_26, %c0_27] : memref<16x896xbf16, #tpu.memory_space<vmem>>, vector<16x896xbf16>
    tpu.vector_store %arg11[%c0_26, %c0_27], %40 {strides = array<i32>} : memref<16x896xbf16, #tpu.memory_space<vmem>>, vector<16x896xbf16>,
    %c0_28 = arith.constant 0 : index
    %c0_29 = arith.constant 0 : index
    %42 = vector.load %arg12[%c0_28, %c0_29] : memref<16x256xf32, #tpu.memory_space<vmem>>, vector<16x256xf32>
    tpu.vector_store %arg12[%c0_28, %c0_29], %14 {strides = array<i32>} : memref<16x256xf32, #tpu.memory_space<vmem>>, vector<16x256xf32>,
    return
  }
  func.func @transform_0(%arg0: i32) -> (i32, i32) {
    %c0_i32 = arith.constant 0 : i32
    %c0_i32_0 = arith.constant 0 : i32
    return %arg0, %c0_i32 : i32, i32
  }
  func.func @transform_1(%arg0: i32) -> (i32, i32) {
    %c0_i32 = arith.constant 0 : i32
    %c0_i32_0 = arith.constant 0 : i32
    return %arg0, %c0_i32 : i32, i32
  }
  func.func @transform_2(%arg0: i32) -> (i32, i32) {
    %c0_i32 = arith.constant 0 : i32
    %c0_i32_0 = arith.constant 0 : i32
    %c0_i32_1 = arith.constant 0 : i32
    return %c0_i32, %c0_i32_0 : i32, i32
  }
  func.func @transform_3(%arg0: i32) -> (i32, i32) {
    %c0_i32 = arith.constant 0 : i32
    %c0_i32_0 = arith.constant 0 : i32
    %c0_i32_1 = arith.constant 0 : i32
    return %c0_i32, %c0_i32_0 : i32, i32
  }
  func.func @transform_4(%arg0: i32) -> (i32, i32) {
    %c0_i32 = arith.constant 0 : i32
    %c0_i32_0 = arith.constant 0 : i32
    %c0_i32_1 = arith.constant 0 : i32
    return %c0_i32, %c0_i32_0 : i32, i32
  }
  func.func @transform_5(%arg0: i32) -> (i32, i32) {
    %c0_i32 = arith.constant 0 : i32
    %c0_i32_0 = arith.constant 0 : i32
    %c0_i32_1 = arith.constant 0 : i32
    return %c0_i32, %c0_i32_0 : i32, i32
  }
  func.func @transform_6(%arg0: i32) -> (i32, i32) {
    %c0_i32 = arith.constant 0 : i32
    %c0_i32_0 = arith.constant 0 : i32
    %c0_i32_1 = arith.constant 0 : i32
    return %c0_i32, %c0_i32_0 : i32, i32
  }
  func.func @transform_7(%arg0: i32) -> (i32, i32) {
    %c0_i32 = arith.constant 0 : i32
    %c0_i32_0 = arith.constant 0 : i32
    %c0_i32_1 = arith.constant 0 : i32
    return %c0_i32, %c0_i32_0 : i32, i32
  }
  func.func @transform_8(%arg0: i32) -> (i32, i32) {
    %c0_i32 = arith.constant 0 : i32
    %c0_i32_0 = arith.constant 0 : i32
    %c0_i32_1 = arith.constant 0 : i32
    return %c0_i32, %c0_i32_0 : i32, i32
  }
  func.func @transform_9(%arg0: i32) -> (i32, i32) {
    %c0_i32 = arith.constant 0 : i32
    %c0_i32_0 = arith.constant 0 : i32
    %c0_i32_1 = arith.constant 0 : i32
    return %c0_i32, %c0_i32_0 : i32, i32
  }
  func.func @transform_10(%arg0: i32) -> (i32, i32) {
    %c0_i32 = arith.constant 0 : i32
    %c0_i32_0 = arith.constant 0 : i32
    return %arg0, %c0_i32 : i32, i32
  }
  func.func @transform_11(%arg0: i32) -> (i32, i32) {
    %c0_i32 = arith.constant 0 : i32
    %c0_i32_0 = arith.constant 0 : i32
    return %arg0, %c0_i32 : i32, i32
  }
}

</mosaic_0001>

<llo_original>
// kernel: vae_forward.1
$region0: #{vae_forward.1}
  #allocation0 [shape = 'u32[]', space=smem, size = 0x4, offset = 0x4, fixed_abs, tag = 'smem constant byte address 0x4 - core index']
  #allocation1 [shape = 'u32[144,128]{1,0:T(1,128)}', space=vmem, size = 0x12000, scoped, tag = 'internal scratch']
  %s0 = inlined_call_operand.vmem [shape: bf16[16,896], index: 0, kind: input, shape index: {}]
  %s1 = inlined_call_operand.vmem [shape: bf16[16,128], index: 1, kind: input, shape index: {}]
  %s2 = inlined_call_operand.hbm [shape: bf16[896,256], index: 2, kind: input, shape index: {}]
  %s3 = inlined_call_operand.vmem [shape: f32[1,256], index: 3, kind: input, shape index: {}]
  %s4 = inlined_call_operand.hbm [shape: bf16[256,256], index: 4, kind: input, shape index: {}]
  %s5 = inlined_call_operand.vmem [shape: f32[1,256], index: 5, kind: input, shape index: {}]
  %s6 = inlined_call_operand.vmem [shape: bf16[128,256], index: 6, kind: input, shape index: {}]
  %s7 = inlined_call_operand.vmem [shape: f32[1,256], index: 7, kind: input, shape index: {}]
  %s8 = inlined_call_operand.hbm [shape: bf16[256,896], index: 8, kind: input, shape index: {}]
  %s9 = inlined_call_operand.vmem [shape: f32[1,896], index: 9, kind: input, shape index: {}]
  %s10 = inlined_call_operand.vmem [shape: bf16[16,896], index: 10, kind: output, shape index: {0}]
  %s11 = inlined_call_operand.vmem [shape: f32[16,256], index: 11, kind: output, shape index: {1}]
  %12 = xla_tuple %s10, %s11
  %s13 = sld [smem:[#allocation0]]
  $region70: #{vae_forward.1} parent=0
    _
  %s15 = ssub.s32 1, %s13
  %s16 = scalar_select 0, %s15, %s13
  $region1: #{vae_forward.1} parent=0
    #allocation2 [shape = 'u8[458752]{0}', space=vmem, size = 0x70000, scoped, tag = 'input window, operand 2, single buffered']
    #allocation3 [shape = 's32[1]{0}', space=sflag, size = 0x4, scoped, tag = 'scoped memory for vae_forward.1']
    #allocation4 [shape = 'u8[131072]{0}', space=vmem, size = 0x20000, scoped, tag = 'input window, operand 4, single buffered']
    #allocation5 [shape = 's32[1]{0}', space=sflag, size = 0x4, scoped, tag = 'scoped memory for vae_forward.1']
    #allocation6 [shape = 'u8[458752]{0}', space=vmem, size = 0x70000, scoped, tag = 'input window, operand 8, single buffered']
    %17 = vsyncpa [#allocation3], 0
    %18 = vsyncpa [#allocation5], 0
    // Predicated region
    $region2: #{vae_forward.1} parent=1 // pred_check
      _
    $region3: #{vae_forward.1} parent=1 // pred_check_branch
      %20 = sbr.rel (0) target = $region5
    $region4: #{vae_forward.1} parent=1 // pred_region
      _
    $region5: #{vae_forward.1} parent=1 // pred_fallthru
      _
    // Predicated region
    $region6: #{vae_forward.1} parent=1 // pred_check
      _
    $region7: #{vae_forward.1} parent=1 // pred_check_branch
      %22 = sbr.rel (0) target = $region9
    $region8: #{vae_forward.1} parent=1 // pred_region
      _
    $region9: #{vae_forward.1} parent=1 // pred_fallthru
      _
    // Predicated region
    $region10: #{vae_forward.1} parent=1 // pred_check
      _
    $region11: #{vae_forward.1} parent=1 // pred_check_branch
      %24 = sbr.rel (0) target = $region13
    $region12: #{vae_forward.1} parent=1 // pred_region
      %s26 = ssub.s32 14336, 14336
      %27 = vsyncadd [#allocation3], %s26
      %s28 = sshll.u32 [#allocation2], 4
      %s29 = int_to_ptr.vmem [resolvable:$true] %s28
      %34 = dma.hbm_to_vmem [thread:$0]  %s2, 14336, %s29, [#allocation3], 128, 128, 8
    $region13: #{vae_forward.1} parent=1 // pred_fallthru
      _
    // Predicated region
    $region14: #{vae_forward.1} parent=1 // pred_check
      _
    $region15: #{vae_forward.1} parent=1 // pred_check_branch
      %36 = sbr.rel (0) target = $region17
    $region16: #{vae_forward.1} parent=1 // pred_region
      _
    $region17: #{vae_forward.1} parent=1 // pred_fallthru
      _
    // Predicated region
    $region18: #{vae_forward.1} parent=1 // pred_check
      _
    $region19: #{vae_forward.1} parent=1 // pred_check_branch
      %38 = sbr.rel (0) target = $region21
    $region20: #{vae_forward.1} parent=1 // pred_region
      %s40 = ssub.s32 4096, 4096
      %41 = vsyncadd [#allocation5], %s40
      %s42 = sshll.u32 [#allocation4], 4
      %s43 = int_to_ptr.vmem [resolvable:$true] %s42
      %48 = dma.hbm_to_vmem [thread:$0]  %s4, 4096, %s43, [#allocation5], 128, 128, 8
    $region21: #{vae_forward.1} parent=1 // pred_fallthru
      _
    // Predicated region
    $region22: #{vae_forward.1} parent=1 // pred_check
      _
    $region23: #{vae_forward.1} parent=1 // pred_check_branch
      %50 = sbr.rel (0) target = $region25
    $region24: #{vae_forward.1} parent=1 // pred_region
      _
    $region25: #{vae_forward.1} parent=1 // pred_fallthru
      _
    // Predicated region
    $region26: #{vae_forward.1} parent=1 // pred_check
      _
    $region27: #{vae_forward.1} parent=1 // pred_check_branch
      %52 = sbr.rel (0) target = $region29
    $region28: #{vae_forward.1} parent=1 // pred_region
      _
    $region29: #{vae_forward.1} parent=1 // pred_fallthru
      _
    // Predicated region
    $region30: #{vae_forward.1} parent=1 // pred_check
      _
    $region31: #{vae_forward.1} parent=1 // pred_check_branch
      %54 = sbr.rel (0) target = $region33
    $region32: #{vae_forward.1} parent=1 // pred_region
      _
    $region33: #{vae_forward.1} parent=1 // pred_fallthru
      _
    // Predicated region
    $region34: #{vae_forward.1} parent=1 // pred_check
      _
    $region35: #{vae_forward.1} parent=1 // pred_check_branch
      %56 = sbr.rel (0) target = $region37
    $region36: #{vae_forward.1} parent=1 // pred_region
      %s58 = ssub.s32 14336, 14336
      %59 = vsyncadd [#allocation5], %s58
      %s60 = sshll.u32 [#allocation6], 4
      %s61 = int_to_ptr.vmem [resolvable:$true] %s60
      %66 = dma.hbm_to_vmem [thread:$0]  %s8, 14336, %s61, [#allocation5], 448, 448, 28
    $region37: #{vae_forward.1} parent=1 // pred_fallthru
      _
    // Predicated region
    $region38: #{vae_forward.1} parent=1 // pred_check
      _
    $region39: #{vae_forward.1} parent=1 // pred_check_branch
      %68 = sbr.rel (0) target = $region41
    $region40: #{vae_forward.1} parent=1 // pred_region
      _
    $region41: #{vae_forward.1} parent=1 // pred_fallthru
      _
    // Predicated region
    $region42: #{vae_forward.1} parent=1 // pred_check
      _
    $region43: #{vae_forward.1} parent=1 // pred_check_branch
      %70 = sbr.rel (0) target = $region45
    $region44: #{vae_forward.1} parent=1 // pred_region
      %71 = dma.done [#allocation3], 14336
    $region45: #{vae_forward.1} parent=1 // pred_fallthru
      _
    // Predicated region
    $region46: #{vae_forward.1} parent=1 // pred_check
      _
    $region47: #{vae_forward.1} parent=1 // pred_check_branch
      %73 = sbr.rel (0) target = $region49
    $region48: #{vae_forward.1} parent=1 // pred_region
      %74 = dma.done [#allocation5], 4096
    $region49: #{vae_forward.1} parent=1 // pred_fallthru
      _
    // Predicated region
    $region50: #{vae_forward.1} parent=1 // pred_check
      _
    $region51: #{vae_forward.1} parent=1 // pred_check_branch
      %76 = sbr.rel (0) target = $region53
    $region52: #{vae_forward.1} parent=1 // pred_region
      %77 = dma.done [#allocation5], 14336
    $region53: #{vae_forward.1} parent=1 // pred_fallthru
      _
    %v79 = vld [vmem:[%s0] sm:$0xff]
    %v80 = vld [vmem:[%s0 + $0x8] sm:$0xff]
    %v81 = vld [vmem:[%s0 + $0x10] sm:$0xff]
    %v82 = vld [vmem:[%s0 + $0x18] sm:$0xf]
    %v83 = vld [vmem:[%s0 + $0x1c] sm:$0xff]
    %v84 = vld [vmem:[%s0 + $0x24] sm:$0xff]
    %v85 = vld [vmem:[%s0 + $0x2c] sm:$0xff]
    %v86 = vld [vmem:[%s0 + $0x34] sm:$0xf]
    %v87 = vld [vmem:[%s1] sm:$0xf]
    %v88 = vld [vmem:[%s1 + $0x4] sm:$0xf]
    %v89 = vld [vmem:[#allocation2] sm:$0xff]
    %v90 = vld [vmem:[#allocation2 + $0x8] sm:$0xff]
    %v91 = vld [vmem:[#allocation2 + $0x10] sm:$0xff]
    %v92 = vld [vmem:[#allocation2 + $0x18] sm:$0xff]
    %v93 = vld [vmem:[#allocation2 + $0x20] sm:$0xff]
    %v94 = vld [vmem:[#allocation2 + $0x28] sm:$0xff]
    %v95 = vld [vmem:[#allocation2 + $0x30] sm:$0xff]
    %v96 = vld [vmem:[#allocation2 + $0x38] sm:$0xff]
    %v97 = vld [vmem:[#allocation2 + $0x40] sm:$0xff]
    %v98 = vld [vmem:[#allocation2 + $0x48] sm:$0xff]
    %v99 = vld [vmem:[#allocation2 + $0x50] sm:$0xff]
    %v100 = vld [vmem:[#allocation2 + $0x58] sm:$0xff]
    %v101 = vld [vmem:[#allocation2 + $0x60] sm:$0xff]
    %v102 = vld [vmem:[#allocation2 + $0x68] sm:$0xff]
    %v103 = vld [vmem:[#allocation2 + $0x70] sm:$0xff]
    %v104 = vld [vmem:[#allocation2 + $0x78] sm:$0xff]
    %v105 = vld [vmem:[#allocation2 + $0x80] sm:$0xff]
    %v106 = vld [vmem:[#allocation2 + $0x88] sm:$0xff]
    %v107 = vld [vmem:[#allocation2 + $0x90] sm:$0xff]
    %v108 = vld [vmem:[#allocation2 + $0x98] sm:$0xff]
    %v109 = vld [vmem:[#allocation2 + $0xa0] sm:$0xff]
    %v110 = vld [vmem:[#allocation2 + $0xa8] sm:$0xff]
    %v111 = vld [vmem:[#allocation2 + $0xb0] sm:$0xff]
    %v112 = vld [vmem:[#allocation2 + $0xb8] sm:$0xff]
    %v113 = vld [vmem:[#allocation2 + $0xc0] sm:$0xff]
    %v114 = vld [vmem:[#allocation2 + $0xc8] sm:$0xff]
    %v115 = vld [vmem:[#allocation2 + $0xd0] sm:$0xff]
    %v116 = vld [vmem:[#allocation2 + $0xd8] sm:$0xff]
    %v117 = vld [vmem:[#allocation2 + $0xe0] sm:$0xff]
    %v118 = vld [vmem:[#allocation2 + $0xe8] sm:$0xff]
    %v119 = vld [vmem:[#allocation2 + $0xf0] sm:$0xff]
    %v120 = vld [vmem:[#allocation2 + $0xf8] sm:$0xff]
    %v121 = vld [vmem:[#allocation2 + $0x100] sm:$0xff]
    %v122 = vld [vmem:[#allocation2 + $0x108] sm:$0xff]
    %v123 = vld [vmem:[#allocation2 + $0x110] sm:$0xff]
    %v124 = vld [vmem:[#allocation2 + $0x118] sm:$0xff]
    %v125 = vld [vmem:[#allocation2 + $0x120] sm:$0xff]
    %v126 = vld [vmem:[#allocation2 + $0x128] sm:$0xff]
    %v127 = vld [vmem:[#allocation2 + $0x130] sm:$0xff]
    %v128 = vld [vmem:[#allocation2 + $0x138] sm:$0xff]
    %v129 = vld [vmem:[#allocation2 + $0x140] sm:$0xff]
    %v130 = vld [vmem:[#allocation2 + $0x148] sm:$0xff]
    %v131 = vld [vmem:[#allocation2 + $0x150] sm:$0xff]
    %v132 = vld [vmem:[#allocation2 + $0x158] sm:$0xff]
    %v133 = vld [vmem:[#allocation2 + $0x160] sm:$0xff]
    %v134 = vld [vmem:[#allocation2 + $0x168] sm:$0xff]
    %v135 = vld [vmem:[#allocation2 + $0x170] sm:$0xff]
    %v136 = vld [vmem:[#allocation2 + $0x178] sm:$0xff]
    %v137 = vld [vmem:[#allocation2 + $0x180] sm:$0xff]
    %v138 = vld [vmem:[#allocation2 + $0x188] sm:$0xff]
    %v139 = vld [vmem:[#allocation2 + $0x190] sm:$0xff]
    %v140 = vld [vmem:[#allocation2 + $0x198] sm:$0xff]
    %v141 = vld [vmem:[#allocation2 + $0x1a0] sm:$0xff]
    %v142 = vld [vmem:[#allocation2 + $0x1a8] sm:$0xff]
    %v143 = vld [vmem:[#allocation2 + $0x1b0] sm:$0xff]
    %v144 = vld [vmem:[#allocation2 + $0x1b8] sm:$0xff]
    %v145 = vld [vmem:[#allocation2 + $0x1c0] sm:$0xff]
    %v146 = vld [vmem:[#allocation2 + $0x1c8] sm:$0xff]
    %v147 = vld [vmem:[#allocation2 + $0x1d0] sm:$0xff]
    %v148 = vld [vmem:[#allocation2 + $0x1d8] sm:$0xff]
    %v149 = vld [vmem:[#allocation2 + $0x1e0] sm:$0xff]
    %v150 = vld [vmem:[#allocation2 + $0x1e8] sm:$0xff]
    %v151 = vld [vmem:[#allocation2 + $0x1f0] sm:$0xff]
    %v152 = vld [vmem:[#allocation2 + $0x1f8] sm:$0xff]
    %v153 = vld [vmem:[#allocation2 + $0x200] sm:$0xff]
    %v154 = vld [vmem:[#allocation2 + $0x208] sm:$0xff]
    %v155 = vld [vmem:[#allocation2 + $0x210] sm:$0xff]
    %v156 = vld [vmem:[#allocation2 + $0x218] sm:$0xff]
    %v157 = vld [vmem:[#allocation2 + $0x220] sm:$0xff]
    %v158 = vld [vmem:[#allocation2 + $0x228] sm:$0xff]
    %v159 = vld [vmem:[#allocation2 + $0x230] sm:$0xff]
    %v160 = vld [vmem:[#allocation2 + $0x238] sm:$0xff]
    %v161 = vld [vmem:[#allocation2 + $0x240] sm:$0xff]
    %v162 = vld [vmem:[#allocation2 + $0x248] sm:$0xff]
    %v163 = vld [vmem:[#allocation2 + $0x250] sm:$0xff]
    %v164 = vld [vmem:[#allocation2 + $0x258] sm:$0xff]
    %v165 = vld [vmem:[#allocation2 + $0x260] sm:$0xff]
    %v166 = vld [vmem:[#allocation2 + $0x268] sm:$0xff]
    %v167 = vld [vmem:[#allocation2 + $0x270] sm:$0xff]
    %v168 = vld [vmem:[#allocation2 + $0x278] sm:$0xff]
    %v169 = vld [vmem:[#allocation2 + $0x280] sm:$0xff]
    %v170 = vld [vmem:[#allocation2 + $0x288] sm:$0xff]
    %v171 = vld [vmem:[#allocation2 + $0x290] sm:$0xff]
    %v172 = vld [vmem:[#allocation2 + $0x298] sm:$0xff]
    %v173 = vld [vmem:[#allocation2 + $0x2a0] sm:$0xff]
    %v174 = vld [vmem:[#allocation2 + $0x2a8] sm:$0xff]
    %v175 = vld [vmem:[#allocation2 + $0x2b0] sm:$0xff]
    %v176 = vld [vmem:[#allocation2 + $0x2b8] sm:$0xff]
    %v177 = vld [vmem:[#allocation2 + $0x2c0] sm:$0xff]
    %v178 = vld [vmem:[#allocation2 + $0x2c8] sm:$0xff]
    %v179 = vld [vmem:[#allocation2 + $0x2d0] sm:$0xff]
    %v180 = vld [vmem:[#allocation2 + $0x2d8] sm:$0xff]
    %v181 = vld [vmem:[#allocation2 + $0x2e0] sm:$0xff]
    %v182 = vld [vmem:[#allocation2 + $0x2e8] sm:$0xff]
    %v183 = vld [vmem:[#allocation2 + $0x2f0] sm:$0xff]
    %v184 = vld [vmem:[#allocation2 + $0x2f8] sm:$0xff]
    %v185 = vld [vmem:[#allocation2 + $0x300] sm:$0xff]
    %v186 = vld [vmem:[#allocation2 + $0x308] sm:$0xff]
    %v187 = vld [vmem:[#allocation2 + $0x310] sm:$0xff]
    %v188 = vld [vmem:[#allocation2 + $0x318] sm:$0xff]
    %v189 = vld [vmem:[#allocation2 + $0x320] sm:$0xff]
    %v190 = vld [vmem:[#allocation2 + $0x328] sm:$0xff]
    %v191 = vld [vmem:[#allocation2 + $0x330] sm:$0xff]
    %v192 = vld [vmem:[#allocation2 + $0x338] sm:$0xff]
    %v193 = vld [vmem:[#allocation2 + $0x340] sm:$0xff]
    %v194 = vld [vmem:[#allocation2 + $0x348] sm:$0xff]
    %v195 = vld [vmem:[#allocation2 + $0x350] sm:$0xff]
    %v196 = vld [vmem:[#allocation2 + $0x358] sm:$0xff]
    %v197 = vld [vmem:[#allocation2 + $0x360] sm:$0xff]
    %v198 = vld [vmem:[#allocation2 + $0x368] sm:$0xff]
    %v199 = vld [vmem:[#allocation2 + $0x370] sm:$0xff]
    %v200 = vld [vmem:[#allocation2 + $0x378] sm:$0xff]
    %v201 = vld [vmem:[%s3] sm:$0x3]
    %v203 = vlaneseq
    %v204 = vshrl.u32 %v203, 7
    %v205 = vsub.s32 0, %v204
    %v206 = vrot.slane %v201, %v205
    %v207 = vlaneseq
    %v208 = vshrl.u32 %v207, 7
    %v209 = vsub.s32 1, %v208
    %v210 = vrot.slane %v201, %v209
    %v221 = vunpack.c.l.b16 %v79
    %v222 = vunpack.c.h.b16 %v79
    %v223 = vunpack.c.l.b16 %v80
    %v224 = vunpack.c.h.b16 %v80
    %v225 = vunpack.c.l.b16 %v81
    %v226 = vunpack.c.h.b16 %v81
    %v227 = vunpack.c.l.b16 %v82
    %v228 = vunpack.c.l.b16 %v83
    %v229 = vunpack.c.h.b16 %v83
    %v230 = vunpack.c.l.b16 %v84
    %v231 = vunpack.c.h.b16 %v84
    %v232 = vunpack.c.l.b16 %v85
    %v233 = vunpack.c.h.b16 %v85
    %v234 = vunpack.c.l.b16 %v86
    %v235 = vpack.c.b16 %v228, %v221
    %v236 = vpack.c.b16 %v229, %v222
    %v237 = vpack.c.b16 %v230, %v223
    %v238 = vpack.c.b16 %v231, %v224
    %v239 = vpack.c.b16 %v232, %v225
    %v240 = vpack.c.b16 %v233, %v226
    %v241 = vpack.c.b16 %v234, %v227
    %v361 = vunpack.c.l.b16 %v89
    %v362 = vunpack.c.h.b16 %v89
    %v363 = vunpack.c.l.b16 %v90
    %v364 = vunpack.c.h.b16 %v90
    %v365 = vunpack.c.l.b16 %v91
    %v366 = vunpack.c.h.b16 %v91
    %v367 = vunpack.c.l.b16 %v92
    %v368 = vunpack.c.h.b16 %v92
    %v369 = vunpack.c.l.b16 %v93
    %v370 = vunpack.c.h.b16 %v93
    %v371 = vunpack.c.l.b16 %v94
    %v372 = vunpack.c.h.b16 %v94
    %v373 = vunpack.c.l.b16 %v95
    %v374 = vunpack.c.h.b16 %v95
    %v375 = vunpack.c.l.b16 %v96
    %v376 = vunpack.c.h.b16 %v96
    %v377 = vunpack.c.l.b16 %v97
    %v378 = vunpack.c.h.b16 %v97
    %v379 = vunpack.c.l.b16 %v98
    %v380 = vunpack.c.h.b16 %v98
    %v381 = vunpack.c.l.b16 %v99
    %v382 = vunpack.c.h.b16 %v99
    %v383 = vunpack.c.l.b16 %v100
    %v384 = vunpack.c.h.b16 %v100
    %v385 = vunpack.c.l.b16 %v101
    %v386 = vunpack.c.h.b16 %v101
    %v387 = vunpack.c.l.b16 %v102
    %v388 = vunpack.c.h.b16 %v102
    %v389 = vunpack.c.l.b16 %v103
    %v390 = vunpack.c.h.b16 %v103
    %v391 = vunpack.c.l.b16 %v104
    %v392 = vunpack.c.h.b16 %v104
    %v393 = vunpack.c.l.b16 %v105
    %v394 = vunpack.c.h.b16 %v105
    %v395 = vunpack.c.l.b16 %v106
    %v396 = vunpack.c.h.b16 %v106
    %v397 = vunpack.c.l.b16 %v107
    %v398 = vunpack.c.h.b16 %v107
    %v399 = vunpack.c.l.b16 %v108
    %v400 = vunpack.c.h.b16 %v108
    %v401 = vunpack.c.l.b16 %v109
    %v402 = vunpack.c.h.b16 %v109
    %v403 = vunpack.c.l.b16 %v110
    %v404 = vunpack.c.h.b16 %v110
    %v405 = vunpack.c.l.b16 %v111
    %v406 = vunpack.c.h.b16 %v111
    %v407 = vunpack.c.l.b16 %v112
    %v408 = vunpack.c.h.b16 %v112
    %v409 = vunpack.c.l.b16 %v113
    %v410 = vunpack.c.h.b16 %v113
    %v411 = vunpack.c.l.b16 %v114
    %v412 = vunpack.c.h.b16 %v114
    %v413 = vunpack.c.l.b16 %v115
    %v414 = vunpack.c.h.b16 %v115
    %v415 = vunpack.c.l.b16 %v116
    %v416 = vunpack.c.h.b16 %v116
    %v417 = vunpack.c.l.b16 %v117
    %v418 = vunpack.c.h.b16 %v117
    %v419 = vunpack.c.l.b16 %v118
    %v420 = vunpack.c.h.b16 %v118
    %v421 = vunpack.c.l.b16 %v119
    %v422 = vunpack.c.h.b16 %v119
    %v423 = vunpack.c.l.b16 %v120
    %v424 = vunpack.c.h.b16 %v120
    %v425 = vunpack.c.l.b16 %v121
    %v426 = vunpack.c.h.b16 %v121
    %v427 = vunpack.c.l.b16 %v122
    %v428 = vunpack.c.h.b16 %v122
    %v429 = vunpack.c.l.b16 %v123
    %v430 = vunpack.c.h.b16 %v123
    %v431 = vunpack.c.l.b16 %v124
    %v432 = vunpack.c.h.b16 %v124
    %v433 = vunpack.c.l.b16 %v125
    %v434 = vunpack.c.h.b16 %v125
    %v435 = vunpack.c.l.b16 %v126
    %v436 = vunpack.c.h.b16 %v126
    %v437 = vunpack.c.l.b16 %v127
    %v438 = vunpack.c.h.b16 %v127
    %v439 = vunpack.c.l.b16 %v128
    %v440 = vunpack.c.h.b16 %v128
    %v441 = vunpack.c.l.b16 %v129
    %v442 = vunpack.c.h.b16 %v129
    %v443 = vunpack.c.l.b16 %v130
    %v444 = vunpack.c.h.b16 %v130
    %v445 = vunpack.c.l.b16 %v131
    %v446 = vunpack.c.h.b16 %v131
    %v447 = vunpack.c.l.b16 %v132
    %v448 = vunpack.c.h.b16 %v132
    %v449 = vunpack.c.l.b16 %v133
    %v450 = vunpack.c.h.b16 %v133
    %v451 = vunpack.c.l.b16 %v134
    %v452 = vunpack.c.h.b16 %v134
    %v453 = vunpack.c.l.b16 %v135
    %v454 = vunpack.c.h.b16 %v135
    %v455 = vunpack.c.l.b16 %v136
    %v456 = vunpack.c.h.b16 %v136
    %v457 = vunpack.c.l.b16 %v137
    %v458 = vunpack.c.h.b16 %v137
    %v459 = vunpack.c.l.b16 %v138
    %v460 = vunpack.c.h.b16 %v138
    %v461 = vunpack.c.l.b16 %v139
    %v462 = vunpack.c.h.b16 %v139
    %v463 = vunpack.c.l.b16 %v140
    %v464 = vunpack.c.h.b16 %v140
    %v465 = vunpack.c.l.b16 %v141
    %v466 = vunpack.c.h.b16 %v141
    %v467 = vunpack.c.l.b16 %v142
    %v468 = vunpack.c.h.b16 %v142
    %v469 = vunpack.c.l.b16 %v143
    %v470 = vunpack.c.h.b16 %v143
    %v471 = vunpack.c.l.b16 %v144
    %v472 = vunpack.c.h.b16 %v144
    %v473 = vunpack.c.l.b16 %v145
    %v474 = vunpack.c.h.b16 %v145
    %v475 = vunpack.c.l.b16 %v146
    %v476 = vunpack.c.h.b16 %v146
    %v477 = vunpack.c.l.b16 %v147
    %v478 = vunpack.c.h.b16 %v147
    %v479 = vunpack.c.l.b16 %v148
    %v480 = vunpack.c.h.b16 %v148
    %v481 = vunpack.c.l.b16 %v149
    %v482 = vunpack.c.h.b16 %v149
    %v483 = vunpack.c.l.b16 %v150
    %v484 = vunpack.c.h.b16 %v150
    %v485 = vunpack.c.l.b16 %v151
    %v486 = vunpack.c.h.b16 %v151
    %v487 = vunpack.c.l.b16 %v152
    %v488 = vunpack.c.h.b16 %v152
    %v489 = vunpack.c.l.b16 %v153
    %v490 = vunpack.c.h.b16 %v153
    %v491 = vunpack.c.l.b16 %v154
    %v492 = vunpack.c.h.b16 %v154
    %v493 = vunpack.c.l.b16 %v155
    %v494 = vunpack.c.h.b16 %v155
    %v495 = vunpack.c.l.b16 %v156
    %v496 = vunpack.c.h.b16 %v156
    %v497 = vunpack.c.l.b16 %v157
    %v498 = vunpack.c.h.b16 %v157
    %v499 = vunpack.c.l.b16 %v158
    %v500 = vunpack.c.h.b16 %v158
    %v501 = vunpack.c.l.b16 %v159
    %v502 = vunpack.c.h.b16 %v159
    %v503 = vunpack.c.l.b16 %v160
    %v504 = vunpack.c.h.b16 %v160
    %v505 = vunpack.c.l.b16 %v161
    %v506 = vunpack.c.h.b16 %v161
    %v507 = vunpack.c.l.b16 %v162
    %v508 = vunpack.c.h.b16 %v162
    %v509 = vunpack.c.l.b16 %v163
    %v510 = vunpack.c.h.b16 %v163
    %v511 = vunpack.c.l.b16 %v164
    %v512 = vunpack.c.h.b16 %v164
    %v513 = vunpack.c.l.b16 %v165
    %v514 = vunpack.c.h.b16 %v165
    %v515 = vunpack.c.l.b16 %v166
    %v516 = vunpack.c.h.b16 %v166
    %v517 = vunpack.c.l.b16 %v167
    %v518 = vunpack.c.h.b16 %v167
    %v519 = vunpack.c.l.b16 %v168
    %v520 = vunpack.c.h.b16 %v168
    %v521 = vunpack.c.l.b16 %v169
    %v522 = vunpack.c.h.b16 %v169
    %v523 = vunpack.c.l.b16 %v170
    %v524 = vunpack.c.h.b16 %v170
    %v525 = vunpack.c.l.b16 %v171
    %v526 = vunpack.c.h.b16 %v171
    %v527 = vunpack.c.l.b16 %v172
    %v528 = vunpack.c.h.b16 %v172
    %v529 = vunpack.c.l.b16 %v173
    %v530 = vunpack.c.h.b16 %v173
    %v531 = vunpack.c.l.b16 %v174
    %v532 = vunpack.c.h.b16 %v174
    %v533 = vunpack.c.l.b16 %v175
    %v534 = vunpack.c.h.b16 %v175
    %v535 = vunpack.c.l.b16 %v176
    %v536 = vunpack.c.h.b16 %v176
    %v537 = vunpack.c.l.b16 %v177
    %v538 = vunpack.c.h.b16 %v177
    %v539 = vunpack.c.l.b16 %v178
    %v540 = vunpack.c.h.b16 %v178
    %v541 = vunpack.c.l.b16 %v179
    %v542 = vunpack.c.h.b16 %v179
    %v543 = vunpack.c.l.b16 %v180
    %v544 = vunpack.c.h.b16 %v180
    %v545 = vunpack.c.l.b16 %v181
    %v546 = vunpack.c.h.b16 %v181
    %v547 = vunpack.c.l.b16 %v182
    %v548 = vunpack.c.h.b16 %v182
    %v549 = vunpack.c.l.b16 %v183
    %v550 = vunpack.c.h.b16 %v183
    %v551 = vunpack.c.l.b16 %v184
    %v552 = vunpack.c.h.b16 %v184
    %v553 = vunpack.c.l.b16 %v185
    %v554 = vunpack.c.h.b16 %v185
    %v555 = vunpack.c.l.b16 %v186
    %v556 = vunpack.c.h.b16 %v186
    %v557 = vunpack.c.l.b16 %v187
    %v558 = vunpack.c.h.b16 %v187
    %v559 = vunpack.c.l.b16 %v188
    %v560 = vunpack.c.h.b16 %v188
    %v561 = vunpack.c.l.b16 %v189
    %v562 = vunpack.c.h.b16 %v189
    %v563 = vunpack.c.l.b16 %v190
    %v564 = vunpack.c.h.b16 %v190
    %v565 = vunpack.c.l.b16 %v191
    %v566 = vunpack.c.h.b16 %v191
    %v567 = vunpack.c.l.b16 %v192
    %v568 = vunpack.c.h.b16 %v192
    %v569 = vunpack.c.l.b16 %v193
    %v570 = vunpack.c.h.b16 %v193
    %v571 = vunpack.c.l.b16 %v194
    %v572 = vunpack.c.h.b16 %v194
    %v573 = vunpack.c.l.b16 %v195
    %v574 = vunpack.c.h.b16 %v195
    %v575 = vunpack.c.l.b16 %v196
    %v576 = vunpack.c.h.b16 %v196
    %v577 = vunpack.c.l.b16 %v197
    %v578 = vunpack.c.h.b16 %v197
    %v579 = vunpack.c.l.b16 %v198
    %v580 = vunpack.c.h.b16 %v198
    %v581 = vunpack.c.l.b16 %v199
    %v582 = vunpack.c.h.b16 %v199
    %v583 = vunpack.c.l.b16 %v200
    %v584 = vunpack.c.h.b16 %v200
    %v585 = vpack.c.b16 %v363, %v361
    %v586 = vpack.c.b16 %v364, %v362
    %v587 = vpack.c.b16 %v367, %v365
    %v588 = vpack.c.b16 %v368, %v366
    %v589 = vpack.c.b16 %v371, %v369
    %v590 = vpack.c.b16 %v372, %v370
    %v591 = vpack.c.b16 %v375, %v373
    %v592 = vpack.c.b16 %v376, %v374
    %v593 = vpack.c.b16 %v379, %v377
    %v594 = vpack.c.b16 %v380, %v378
    %v595 = vpack.c.b16 %v383, %v381
    %v596 = vpack.c.b16 %v384, %v382
    %v597 = vpack.c.b16 %v387, %v385
    %v598 = vpack.c.b16 %v388, %v386
    %v599 = vpack.c.b16 %v391, %v389
    %v600 = vpack.c.b16 %v392, %v390
    %v601 = vpack.c.b16 %v395, %v393
    %v602 = vpack.c.b16 %v396, %v394
    %v603 = vpack.c.b16 %v399, %v397
    %v604 = vpack.c.b16 %v400, %v398
    %v605 = vpack.c.b16 %v403, %v401
    %v606 = vpack.c.b16 %v404, %v402
    %v607 = vpack.c.b16 %v407, %v405
    %v608 = vpack.c.b16 %v408, %v406
    %v609 = vpack.c.b16 %v411, %v409
    %v610 = vpack.c.b16 %v412, %v410
    %v611 = vpack.c.b16 %v415, %v413
    %v612 = vpack.c.b16 %v416, %v414
    %v613 = vpack.c.b16 %v419, %v417
    %v614 = vpack.c.b16 %v420, %v418
    %v615 = vpack.c.b16 %v423, %v421
    %v616 = vpack.c.b16 %v424, %v422
    %v617 = vpack.c.b16 %v427, %v425
    %v618 = vpack.c.b16 %v428, %v426
    %v619 = vpack.c.b16 %v431, %v429
    %v620 = vpack.c.b16 %v432, %v430
    %v621 = vpack.c.b16 %v435, %v433
    %v622 = vpack.c.b16 %v436, %v434
    %v623 = vpack.c.b16 %v439, %v437
    %v624 = vpack.c.b16 %v440, %v438
    %v625 = vpack.c.b16 %v443, %v441
    %v626 = vpack.c.b16 %v444, %v442
    %v627 = vpack.c.b16 %v447, %v445
    %v628 = vpack.c.b16 %v448, %v446
    %v629 = vpack.c.b16 %v451, %v449
    %v630 = vpack.c.b16 %v452, %v450
    %v631 = vpack.c.b16 %v455, %v453
    %v632 = vpack.c.b16 %v456, %v454
    %v633 = vpack.c.b16 %v459, %v457
    %v634 = vpack.c.b16 %v460, %v458
    %v635 = vpack.c.b16 %v463, %v461
    %v636 = vpack.c.b16 %v464, %v462
    %v637 = vpack.c.b16 %v467, %v465
    %v638 = vpack.c.b16 %v468, %v466
    %v639 = vpack.c.b16 %v471, %v469
    %v640 = vpack.c.b16 %v472, %v470
    %v641 = vpack.c.b16 %v475, %v473
    %v642 = vpack.c.b16 %v476, %v474
    %v643 = vpack.c.b16 %v479, %v477
    %v644 = vpack.c.b16 %v480, %v478
    %v645 = vpack.c.b16 %v483, %v481
    %v646 = vpack.c.b16 %v484, %v482
    %v647 = vpack.c.b16 %v487, %v485
    %v648 = vpack.c.b16 %v488, %v486
    %v649 = vpack.c.b16 %v491, %v489
    %v650 = vpack.c.b16 %v492, %v490
    %v651 = vpack.c.b16 %v495, %v493
    %v652 = vpack.c.b16 %v496, %v494
    %v653 = vpack.c.b16 %v499, %v497
    %v654 = vpack.c.b16 %v500, %v498
    %v655 = vpack.c.b16 %v503, %v501
    %v656 = vpack.c.b16 %v504, %v502
    %v657 = vpack.c.b16 %v507, %v505
    %v658 = vpack.c.b16 %v508, %v506
    %v659 = vpack.c.b16 %v511, %v509
    %v660 = vpack.c.b16 %v512, %v510
    %v661 = vpack.c.b16 %v515, %v513
    %v662 = vpack.c.b16 %v516, %v514
    %v663 = vpack.c.b16 %v519, %v517
    %v664 = vpack.c.b16 %v520, %v518
    %v665 = vpack.c.b16 %v523, %v521
    %v666 = vpack.c.b16 %v524, %v522
    %v667 = vpack.c.b16 %v527, %v525
    %v668 = vpack.c.b16 %v528, %v526
    %v669 = vpack.c.b16 %v531, %v529
    %v670 = vpack.c.b16 %v532, %v530
    %v671 = vpack.c.b16 %v535, %v533
    %v672 = vpack.c.b16 %v536, %v534
    %v673 = vpack.c.b16 %v539, %v537
    %v674 = vpack.c.b16 %v540, %v538
    %v675 = vpack.c.b16 %v543, %v541
    %v676 = vpack.c.b16 %v544, %v542
    %v677 = vpack.c.b16 %v547, %v545
    %v678 = vpack.c.b16 %v548, %v546
    %v679 = vpack.c.b16 %v551, %v549
    %v680 = vpack.c.b16 %v552, %v550
    %v681 = vpack.c.b16 %v555, %v553
    %v682 = vpack.c.b16 %v556, %v554
    %v683 = vpack.c.b16 %v559, %v557
    %v684 = vpack.c.b16 %v560, %v558
    %v685 = vpack.c.b16 %v563, %v561
    %v686 = vpack.c.b16 %v564, %v562
    %v687 = vpack.c.b16 %v567, %v565
    %v688 = vpack.c.b16 %v568, %v566
    %v689 = vpack.c.b16 %v571, %v569
    %v690 = vpack.c.b16 %v572, %v570
    %v691 = vpack.c.b16 %v575, %v573
    %v692 = vpack.c.b16 %v576, %v574
    %v693 = vpack.c.b16 %v579, %v577
    %v694 = vpack.c.b16 %v580, %v578
    %v695 = vpack.c.b16 %v583, %v581
    %v696 = vpack.c.b16 %v584, %v582
    %809 = vmatprep.subr.bf16.mxu0 %v586
    %810 = vmatpush1.bf16.msra.mxu0 %v585
    %811 = vmatprep.subr.bf16.mxu0 %v588
    %812 = vmatpush1.bf16.msra.mxu0 %v587
    %813 = vmatprep.subr.bf16.mxu0 %v590
    %814 = vmatpush1.bf16.msra.mxu0 %v589
    %815 = vmatprep.subr.bf16.mxu0 %v592
    %816 = vmatpush1.bf16.msra.mxu0 %v591
    %817 = vmatprep.subr.bf16.mxu0 %v594
    %818 = vmatpush1.bf16.msra.mxu0 %v593
    %819 = vmatprep.subr.bf16.mxu0 %v596
    %820 = vmatpush1.bf16.msra.mxu0 %v595
    %821 = vmatprep.subr.bf16.mxu0 %v598
    %822 = vmatpush1.bf16.msra.mxu0 %v597
    %823 = vmatprep.subr.bf16.mxu0 %v600
    %824 = vmatpush1.bf16.msra.mxu0 %v599
    %825 = vmatprep.subr.bf16.mxu0 %v602
    %826 = vmatpush1.bf16.msra.mxu0 %v601
    %827 = vmatprep.subr.bf16.mxu0 %v604
    %828 = vmatpush1.bf16.msra.mxu0 %v603
    %829 = vmatprep.subr.bf16.mxu0 %v606
    %830 = vmatpush1.bf16.msra.mxu0 %v605
    %831 = vmatprep.subr.bf16.mxu0 %v608
    %832 = vmatpush1.bf16.msra.mxu0 %v607
    %833 = vmatprep.subr.bf16.mxu0 %v610
    %834 = vmatpush1.bf16.msra.mxu0 %v609
    %835 = vmatprep.subr.bf16.mxu0 %v612
    %836 = vmatpush1.bf16.msra.mxu0 %v611
    %837 = vmatprep.subr.bf16.mxu0 %v614
    %838 = vmatpush1.bf16.msra.mxu0 %v613
    %839 = vmatprep.subr.bf16.mxu0 %v616
    %840 = vmatpush1.bf16.msra.mxu0 %v615
    %841 = vmatprep.mubr.bf16.mxu0 %v236
    %842 = vmatmul.mubr.bf16.gmra.mrb[0].mxu0 %v235
    %v843 = vpop.f32.mrb[0].mxu0
    %v844 = vadd.f32 %v206, %v843
    %v845 = vpop.f32.mrb[0].mxu0
    %v846 = vadd.f32 %v210, %v845
    %v847 = vpop.f32.mrb[0].mxu0
    %v848 = vadd.f32 %v206, %v847
    %v849 = vpop.f32.mrb[0].mxu0
    %v850 = vadd.f32 %v210, %v849
    %851 = vdwg.mxu0
    %852 = vmatprep.subr.bf16.mxu0 %v618
    %853 = vmatpush1.bf16.msra.mxu0 %v617
    %854 = vmatprep.subr.bf16.mxu0 %v620
    %855 = vmatpush1.bf16.msra.mxu0 %v619
    %856 = vmatprep.subr.bf16.mxu0 %v622
    %857 = vmatpush1.bf16.msra.mxu0 %v621
    %858 = vmatprep.subr.bf16.mxu0 %v624
    %859 = vmatpush1.bf16.msra.mxu0 %v623
    %860 = vmatprep.subr.bf16.mxu0 %v626
    %861 = vmatpush1.bf16.msra.mxu0 %v625
    %862 = vmatprep.subr.bf16.mxu0 %v628
    %863 = vmatpush1.bf16.msra.mxu0 %v627
    %864 = vmatprep.subr.bf16.mxu0 %v630
    %865 = vmatpush1.bf16.msra.mxu0 %v629
    %866 = vmatprep.subr.bf16.mxu0 %v632
    %867 = vmatpush1.bf16.msra.mxu0 %v631
    %868 = vmatprep.subr.bf16.mxu0 %v634
    %869 = vmatpush1.bf16.msra.mxu0 %v633
    %870 = vmatprep.subr.bf16.mxu0 %v636
    %871 = vmatpush1.bf16.msra.mxu0 %v635
    %872 = vmatprep.subr.bf16.mxu0 %v638
    %873 = vmatpush1.bf16.msra.mxu0 %v637
    %874 = vmatprep.subr.bf16.mxu0 %v640
    %875 = vmatpush1.bf16.msra.mxu0 %v639
    %876 = vmatprep.subr.bf16.mxu0 %v642
    %877 = vmatpush1.bf16.msra.mxu0 %v641
    %878 = vmatprep.subr.bf16.mxu0 %v644
    %879 = vmatpush1.bf16.msra.mxu0 %v643
    %880 = vmatprep.subr.bf16.mxu0 %v646
    %881 = vmatpush1.bf16.msra.mxu0 %v645
    %882 = vmatprep.subr.bf16.mxu0 %v648
    %883 = vmatpush1.bf16.msra.mxu0 %v647
    %884 = vmatprep.mubr.bf16.mxu0 %v238
    %885 = vmatmul.mubr.bf16.gmra.mrb[0].mxu0 %v237
    %v886 = vpop.f32.mrb[0].mxu0
    %v887 = vadd.f32 %v844, %v886
    %v888 = vpop.f32.mrb[0].mxu0
    %v889 = vadd.f32 %v846, %v888
    %v890 = vpop.f32.mrb[0].mxu0
    %v891 = vadd.f32 %v848, %v890
    %v892 = vpop.f32.mrb[0].mxu0
    %v893 = vadd.f32 %v850, %v892
    %894 = vdwg.mxu0
    %895 = vmatprep.subr.bf16.mxu0 %v650
    %896 = vmatpush1.bf16.msra.mxu0 %v649
    %897 = vmatprep.subr.bf16.mxu0 %v652
    %898 = vmatpush1.bf16.msra.mxu0 %v651
    %899 = vmatprep.subr.bf16.mxu0 %v654
    %900 = vmatpush1.bf16.msra.mxu0 %v653
    %901 = vmatprep.subr.bf16.mxu0 %v656
    %902 = vmatpush1.bf16.msra.mxu0 %v655
    %903 = vmatprep.subr.bf16.mxu0 %v658
    %904 = vmatpush1.bf16.msra.mxu0 %v657
    %905 = vmatprep.subr.bf16.mxu0 %v660
    %906 = vmatpush1.bf16.msra.mxu0 %v659
    %907 = vmatprep.subr.bf16.mxu0 %v662
    %908 = vmatpush1.bf16.msra.mxu0 %v661
    %909 = vmatprep.subr.bf16.mxu0 %v664
    %910 = vmatpush1.bf16.msra.mxu0 %v663
    %911 = vmatprep.subr.bf16.mxu0 %v666
    %912 = vmatpush1.bf16.msra.mxu0 %v665
    %913 = vmatprep.subr.bf16.mxu0 %v668
    %914 = vmatpush1.bf16.msra.mxu0 %v667
    %915 = vmatprep.subr.bf16.mxu0 %v670
    %916 = vmatpush1.bf16.msra.mxu0 %v669
    %917 = vmatprep.subr.bf16.mxu0 %v672
    %918 = vmatpush1.bf16.msra.mxu0 %v671
    %919 = vmatprep.subr.bf16.mxu0 %v674
    %920 = vmatpush1.bf16.msra.mxu0 %v673
    %921 = vmatprep.subr.bf16.mxu0 %v676
    %922 = vmatpush1.bf16.msra.mxu0 %v675
    %923 = vmatprep.subr.bf16.mxu0 %v678
    %924 = vmatpush1.bf16.msra.mxu0 %v677
    %925 = vmatprep.subr.bf16.mxu0 %v680
    %926 = vmatpush1.bf16.msra.mxu0 %v679
    %927 = vmatprep.mubr.bf16.mxu0 %v240
    %928 = vmatmul.mubr.bf16.gmra.mrb[0].mxu0 %v239
    %v929 = vpop.f32.mrb[0].mxu0
    %v930 = vadd.f32 %v887, %v929
    %v931 = vpop.f32.mrb[0].mxu0
    %v932 = vadd.f32 %v889, %v931
    %v933 = vpop.f32.mrb[0].mxu0
    %v934 = vadd.f32 %v891, %v933
    %v935 = vpop.f32.mrb[0].mxu0
    %v936 = vadd.f32 %v893, %v935
    %937 = vdwg.mxu0
    %938 = vmatprep.subr.bf16.mxu0 %v682
    %939 = vmatpush1.bf16.msra.mxu0 %v681
    %940 = vmatprep.subr.bf16.mxu0 %v684
    %941 = vmatpush1.bf16.msra.mxu0 %v683
    %942 = vmatprep.subr.bf16.mxu0 %v686
    %943 = vmatpush1.bf16.msra.mxu0 %v685
    %944 = vmatprep.subr.bf16.mxu0 %v688
    %945 = vmatpush1.bf16.msra.mxu0 %v687
    %946 = vmatprep.subr.bf16.mxu0 %v690
    %947 = vmatpush1.bf16.msra.mxu0 %v689
    %948 = vmatprep.subr.bf16.mxu0 %v692
    %949 = vmatpush1.bf16.msra.mxu0 %v691
    %950 = vmatprep.subr.bf16.mxu0 %v694
    %951 = vmatpush1.bf16.msra.mxu0 %v693
    %952 = vmatprep.subr.bf16.mxu0 %v696
    %953 = vmatpush1.bf16.msra.mxu0 %v695
    %954 = vmatprep.subr.bf16.mxu0 0
    %955 = vmatpush1.bf16.msra.mxu0 0
    %956 = vmatprep.subr.bf16.mxu0 0
    %957 = vmatpush1.bf16.msra.mxu0 0
    %958 = vmatprep.subr.bf16.mxu0 0
    %959 = vmatpush1.bf16.msra.mxu0 0
    %960 = vmatprep.subr.bf16.mxu0 0
    %961 = vmatpush1.bf16.msra.mxu0 0
    %962 = vmatprep.subr.bf16.mxu0 0
    %963 = vmatpush1.bf16.msra.mxu0 0
    %964 = vmatprep.subr.bf16.mxu0 0
    %965 = vmatpush1.bf16.msra.mxu0 0
    %966 = vmatprep.subr.bf16.mxu0 0
    %967 = vmatpush1.bf16.msra.mxu0 0
    %968 = vmatprep.subr.bf16.mxu0 0
    %969 = vmatpush1.bf16.msra.mxu0 0
    %970 = vmatprep.mubr.bf16.mxu0 0
    %971 = vmatmul.mubr.bf16.gmra.mrb[0].mxu0 %v241
    %v972 = vpop.f32.mrb[0].mxu0
    %v973 = vadd.f32 %v930, %v972
    %v974 = vpop.f32.mrb[0].mxu0
    %v975 = vadd.f32 %v932, %v974
    %v976 = vpop.f32.mrb[0].mxu0
    %v977 = vadd.f32 %v934, %v976
    %v978 = vpop.f32.mrb[0].mxu0
    %v979 = vadd.f32 %v936, %v978
    %980 = vdwg.mxu0
    %v981 = vmax.f32 %v973, 0.0
    %v982 = vmax.f32 %v975, 0.0
    %v983 = vmax.f32 %v977, 0.0
    %v984 = vmax.f32 %v979, 0.0
    %v985 = vpack.c.bf16 %v983, %v981
    %v986 = vpack.c.bf16 %v984, %v982
    %v987 = vld [vmem:[#allocation4] sm:$0xff]
    %v988 = vld [vmem:[#allocation4 + $0x8] sm:$0xff]
    %v989 = vld [vmem:[#allocation4 + $0x10] sm:$0xff]
    %v990 = vld [vmem:[#allocation4 + $0x18] sm:$0xff]
    %v991 = vld [vmem:[#allocation4 + $0x20] sm:$0xff]
    %v992 = vld [vmem:[#allocation4 + $0x28] sm:$0xff]
    %v993 = vld [vmem:[#allocation4 + $0x30] sm:$0xff]
    %v994 = vld [vmem:[#allocation4 + $0x38] sm:$0xff]
    %v995 = vld [vmem:[#allocation4 + $0x40] sm:$0xff]
    %v996 = vld [vmem:[#allocation4 + $0x48] sm:$0xff]
    %v997 = vld [vmem:[#allocation4 + $0x50] sm:$0xff]
    %v998 = vld [vmem:[#allocation4 + $0x58] sm:$0xff]
    %v999 = vld [vmem:[#allocation4 + $0x60] sm:$0xff]
    %v1000 = vld [vmem:[#allocation4 + $0x68] sm:$0xff]
    %v1001 = vld [vmem:[#allocation4 + $0x70] sm:$0xff]
    %v1002 = vld [vmem:[#allocation4 + $0x78] sm:$0xff]
    %v1003 = vld [vmem:[#allocation4 + $0x80] sm:$0xff]
    %v1004 = vld [vmem:[#allocation4 + $0x88] sm:$0xff]
    %v1005 = vld [vmem:[#allocation4 + $0x90] sm:$0xff]
    %v1006 = vld [vmem:[#allocation4 + $0x98] sm:$0xff]
    %v1007 = vld [vmem:[#allocation4 + $0xa0] sm:$0xff]
    %v1008 = vld [vmem:[#allocation4 + $0xa8] sm:$0xff]
    %v1009 = vld [vmem:[#allocation4 + $0xb0] sm:$0xff]
    %v1010 = vld [vmem:[#allocation4 + $0xb8] sm:$0xff]
    %v1011 = vld [vmem:[#allocation4 + $0xc0] sm:$0xff]
    %v1012 = vld [vmem:[#allocation4 + $0xc8] sm:$0xff]
    %v1013 = vld [vmem:[#allocation4 + $0xd0] sm:$0xff]
    %v1014 = vld [vmem:[#allocation4 + $0xd8] sm:$0xff]
    %v1015 = vld [vmem:[#allocation4 + $0xe0] sm:$0xff]
    %v1016 = vld [vmem:[#allocation4 + $0xe8] sm:$0xff]
    %v1017 = vld [vmem:[#allocation4 + $0xf0] sm:$0xff]
    %v1018 = vld [vmem:[#allocation4 + $0xf8] sm:$0xff]
    %v1019 = vld [vmem:[%s5] sm:$0x3]
    %v1021 = vlaneseq
    %v1022 = vshrl.u32 %v1021, 7
    %v1023 = vsub.s32 0, %v1022
    %v1024 = vrot.slane %v1019, %v1023
    %v1025 = vlaneseq
    %v1026 = vshrl.u32 %v1025, 7
    %v1027 = vsub.s32 1, %v1026
    %v1028 = vrot.slane %v1019, %v1027
    %v1063 = vunpack.c.l.b16 %v987
    %v1064 = vunpack.c.h.b16 %v987
    %v1065 = vunpack.c.l.b16 %v988
    %v1066 = vunpack.c.h.b16 %v988
    %v1067 = vunpack.c.l.b16 %v989
    %v1068 = vunpack.c.h.b16 %v989
    %v1069 = vunpack.c.l.b16 %v990
    %v1070 = vunpack.c.h.b16 %v990
    %v1071 = vunpack.c.l.b16 %v991
    %v1072 = vunpack.c.h.b16 %v991
    %v1073 = vunpack.c.l.b16 %v992
    %v1074 = vunpack.c.h.b16 %v992
    %v1075 = vunpack.c.l.b16 %v993
    %v1076 = vunpack.c.h.b16 %v993
    %v1077 = vunpack.c.l.b16 %v994
    %v1078 = vunpack.c.h.b16 %v994
    %v1079 = vunpack.c.l.b16 %v995
    %v1080 = vunpack.c.h.b16 %v995
    %v1081 = vunpack.c.l.b16 %v996
    %v1082 = vunpack.c.h.b16 %v996
    %v1083 = vunpack.c.l.b16 %v997
    %v1084 = vunpack.c.h.b16 %v997
    %v1085 = vunpack.c.l.b16 %v998
    %v1086 = vunpack.c.h.b16 %v998
    %v1087 = vunpack.c.l.b16 %v999
    %v1088 = vunpack.c.h.b16 %v999
    %v1089 = vunpack.c.l.b16 %v1000
    %v1090 = vunpack.c.h.b16 %v1000
    %v1091 = vunpack.c.l.b16 %v1001
    %v1092 = vunpack.c.h.b16 %v1001
    %v1093 = vunpack.c.l.b16 %v1002
    %v1094 = vunpack.c.h.b16 %v1002
    %v1095 = vunpack.c.l.b16 %v1003
    %v1096 = vunpack.c.h.b16 %v1003
    %v1097 = vunpack.c.l.b16 %v1004
    %v1098 = vunpack.c.h.b16 %v1004
    %v1099 = vunpack.c.l.b16 %v1005
    %v1100 = vunpack.c.h.b16 %v1005
    %v1101 = vunpack.c.l.b16 %v1006
    %v1102 = vunpack.c.h.b16 %v1006
    %v1103 = vunpack.c.l.b16 %v1007
    %v1104 = vunpack.c.h.b16 %v1007
    %v1105 = vunpack.c.l.b16 %v1008
    %v1106 = vunpack.c.h.b16 %v1008
    %v1107 = vunpack.c.l.b16 %v1009
    %v1108 = vunpack.c.h.b16 %v1009
    %v1109 = vunpack.c.l.b16 %v1010
    %v1110 = vunpack.c.h.b16 %v1010
    %v1111 = vunpack.c.l.b16 %v1011
    %v1112 = vunpack.c.h.b16 %v1011
    %v1113 = vunpack.c.l.b16 %v1012
    %v1114 = vunpack.c.h.b16 %v1012
    %v1115 = vunpack.c.l.b16 %v1013
    %v1116 = vunpack.c.h.b16 %v1013
    %v1117 = vunpack.c.l.b16 %v1014
    %v1118 = vunpack.c.h.b16 %v1014
    %v1119 = vunpack.c.l.b16 %v1015
    %v1120 = vunpack.c.h.b16 %v1015
    %v1121 = vunpack.c.l.b16 %v1016
    %v1122 = vunpack.c.h.b16 %v1016
    %v1123 = vunpack.c.l.b16 %v1017
    %v1124 = vunpack.c.h.b16 %v1017
    %v1125 = vunpack.c.l.b16 %v1018
    %v1126 = vunpack.c.h.b16 %v1018
    %v1127 = vpack.c.b16 %v1065, %v1063
    %v1128 = vpack.c.b16 %v1066, %v1064
    %v1129 = vpack.c.b16 %v1069, %v1067
    %v1130 = vpack.c.b16 %v1070, %v1068
    %v1131 = vpack.c.b16 %v1073, %v1071
    %v1132 = vpack.c.b16 %v1074, %v1072
    %v1133 = vpack.c.b16 %v1077, %v1075
    %v1134 = vpack.c.b16 %v1078, %v1076
    %v1135 = vpack.c.b16 %v1081, %v1079
    %v1136 = vpack.c.b16 %v1082, %v1080
    %v1137 = vpack.c.b16 %v1085, %v1083
    %v1138 = vpack.c.b16 %v1086, %v1084
    %v1139 = vpack.c.b16 %v1089, %v1087
    %v1140 = vpack.c.b16 %v1090, %v1088
    %v1141 = vpack.c.b16 %v1093, %v1091
    %v1142 = vpack.c.b16 %v1094, %v1092
    %v1143 = vpack.c.b16 %v1097, %v1095
    %v1144 = vpack.c.b16 %v1098, %v1096
    %v1145 = vpack.c.b16 %v1101, %v1099
    %v1146 = vpack.c.b16 %v1102, %v1100
    %v1147 = vpack.c.b16 %v1105, %v1103
    %v1148 = vpack.c.b16 %v1106, %v1104
    %v1149 = vpack.c.b16 %v1109, %v1107
    %v1150 = vpack.c.b16 %v1110, %v1108
    %v1151 = vpack.c.b16 %v1113, %v1111
    %v1152 = vpack.c.b16 %v1114, %v1112
    %v1153 = vpack.c.b16 %v1117, %v1115
    %v1154 = vpack.c.b16 %v1118, %v1116
    %v1155 = vpack.c.b16 %v1121, %v1119
    %v1156 = vpack.c.b16 %v1122, %v1120
    %v1157 = vpack.c.b16 %v1125, %v1123
    %v1158 = vpack.c.b16 %v1126, %v1124
    %1191 = vmatprep.subr.bf16.mxu0 %v1128
    %1192 = vmatpush1.bf16.msra.mxu0 %v1127
    %1193 = vmatprep.subr.bf16.mxu0 %v1130
    %1194 = vmatpush1.bf16.msra.mxu0 %v1129
    %1195 = vmatprep.subr.bf16.mxu0 %v1132
    %1196 = vmatpush1.bf16.msra.mxu0 %v1131
    %1197 = vmatprep.subr.bf16.mxu0 %v1134
    %1198 = vmatpush1.bf16.msra.mxu0 %v1133
    %1199 = vmatprep.subr.bf16.mxu0 %v1136
    %1200 = vmatpush1.bf16.msra.mxu0 %v1135
    %1201 = vmatprep.subr.bf16.mxu0 %v1138
    %1202 = vmatpush1.bf16.msra.mxu0 %v1137
    %1203 = vmatprep.subr.bf16.mxu0 %v1140
    %1204 = vmatpush1.bf16.msra.mxu0 %v1139
    %1205 = vmatprep.subr.bf16.mxu0 %v1142
    %1206 = vmatpush1.bf16.msra.mxu0 %v1141
    %1207 = vmatprep.subr.bf16.mxu0 %v1144
    %1208 = vmatpush1.bf16.msra.mxu0 %v1143
    %1209 = vmatprep.subr.bf16.mxu0 %v1146
    %1210 = vmatpush1.bf16.msra.mxu0 %v1145
    %1211 = vmatprep.subr.bf16.mxu0 %v1148
    %1212 = vmatpush1.bf16.msra.mxu0 %v1147
    %1213 = vmatprep.subr.bf16.mxu0 %v1150
    %1214 = vmatpush1.bf16.msra.mxu0 %v1149
    %1215 = vmatprep.subr.bf16.mxu0 %v1152
    %1216 = vmatpush1.bf16.msra.mxu0 %v1151
    %1217 = vmatprep.subr.bf16.mxu0 %v1154
    %1218 = vmatpush1.bf16.msra.mxu0 %v1153
    %1219 = vmatprep.subr.bf16.mxu0 %v1156
    %1220 = vmatpush1.bf16.msra.mxu0 %v1155
    %1221 = vmatprep.subr.bf16.mxu0 %v1158
    %1222 = vmatpush1.bf16.msra.mxu0 %v1157
    %1223 = vmatprep.mubr.bf16.mxu0 %v986
    %1224 = vmatmul.mubr.bf16.gmra.mrb[0].mxu0 %v985
    %v1225 = vpop.f32.mrb[0].mxu0
    %v1226 = vadd.f32 %v1024, %v1225
    %v1227 = vpop.f32.mrb[0].mxu0
    %v1228 = vadd.f32 %v1028, %v1227
    %v1229 = vpop.f32.mrb[0].mxu0
    %v1230 = vadd.f32 %v1024, %v1229
    %v1231 = vpop.f32.mrb[0].mxu0
    %v1232 = vadd.f32 %v1028, %v1231
    %1233 = vdwg.mxu0
    %v1234 = vunpack.c.l.bf16 %v87
    %v1235 = vunpack.c.l.bf16 %v88
    %v1236 = vmul.f32 %v1228, %v1234
    %v1237 = vmul.f32 %v1232, %v1235
    %v1238 = vadd.f32 %v1226, %v1236
    %v1239 = vadd.f32 %v1230, %v1237
    %v1240 = vpack.c.bf16 %v1239, %v1238
    %v1241 = vld [vmem:[%s6] sm:$0xff]
    %v1242 = vld [vmem:[%s6 + $0x8] sm:$0xff]
    %v1243 = vld [vmem:[%s6 + $0x10] sm:$0xff]
    %v1244 = vld [vmem:[%s6 + $0x18] sm:$0xff]
    %v1245 = vld [vmem:[%s6 + $0x20] sm:$0xff]
    %v1246 = vld [vmem:[%s6 + $0x28] sm:$0xff]
    %v1247 = vld [vmem:[%s6 + $0x30] sm:$0xff]
    %v1248 = vld [vmem:[%s6 + $0x38] sm:$0xff]
    %v1249 = vld [vmem:[%s6 + $0x40] sm:$0xff]
    %v1250 = vld [vmem:[%s6 + $0x48] sm:$0xff]
    %v1251 = vld [vmem:[%s6 + $0x50] sm:$0xff]
    %v1252 = vld [vmem:[%s6 + $0x58] sm:$0xff]
    %v1253 = vld [vmem:[%s6 + $0x60] sm:$0xff]
    %v1254 = vld [vmem:[%s6 + $0x68] sm:$0xff]
    %v1255 = vld [vmem:[%s6 + $0x70] sm:$0xff]
    %v1256 = vld [vmem:[%s6 + $0x78] sm:$0xff]
    %v1257 = vld [vmem:[%s7] sm:$0x3]
    %v1259 = vlaneseq
    %v1260 = vshrl.u32 %v1259, 7
    %v1261 = vsub.s32 0, %v1260
    %v1262 = vrot.slane %v1257, %v1261
    %v1263 = vlaneseq
    %v1264 = vshrl.u32 %v1263, 7
    %v1265 = vsub.s32 1, %v1264
    %v1266 = vrot.slane %v1257, %v1265
    %v1285 = vunpack.c.l.b16 %v1241
    %v1286 = vunpack.c.h.b16 %v1241
    %v1287 = vunpack.c.l.b16 %v1242
    %v1288 = vunpack.c.h.b16 %v1242
    %v1289 = vunpack.c.l.b16 %v1243
    %v1290 = vunpack.c.h.b16 %v1243
    %v1291 = vunpack.c.l.b16 %v1244
    %v1292 = vunpack.c.h.b16 %v1244
    %v1293 = vunpack.c.l.b16 %v1245
    %v1294 = vunpack.c.h.b16 %v1245
    %v1295 = vunpack.c.l.b16 %v1246
    %v1296 = vunpack.c.h.b16 %v1246
    %v1297 = vunpack.c.l.b16 %v1247
    %v1298 = vunpack.c.h.b16 %v1247
    %v1299 = vunpack.c.l.b16 %v1248
    %v1300 = vunpack.c.h.b16 %v1248
    %v1301 = vunpack.c.l.b16 %v1249
    %v1302 = vunpack.c.h.b16 %v1249
    %v1303 = vunpack.c.l.b16 %v1250
    %v1304 = vunpack.c.h.b16 %v1250
    %v1305 = vunpack.c.l.b16 %v1251
    %v1306 = vunpack.c.h.b16 %v1251
    %v1307 = vunpack.c.l.b16 %v1252
    %v1308 = vunpack.c.h.b16 %v1252
    %v1309 = vunpack.c.l.b16 %v1253
    %v1310 = vunpack.c.h.b16 %v1253
    %v1311 = vunpack.c.l.b16 %v1254
    %v1312 = vunpack.c.h.b16 %v1254
    %v1313 = vunpack.c.l.b16 %v1255
    %v1314 = vunpack.c.h.b16 %v1255
    %v1315 = vunpack.c.l.b16 %v1256
    %v1316 = vunpack.c.h.b16 %v1256
    %v1317 = vpack.c.b16 %v1287, %v1285
    %v1318 = vpack.c.b16 %v1288, %v1286
    %v1319 = vpack.c.b16 %v1291, %v1289
    %v1320 = vpack.c.b16 %v1292, %v1290
    %v1321 = vpack.c.b16 %v1295, %v1293
    %v1322 = vpack.c.b16 %v1296, %v1294
    %v1323 = vpack.c.b16 %v1299, %v1297
    %v1324 = vpack.c.b16 %v1300, %v1298
    %v1325 = vpack.c.b16 %v1303, %v1301
    %v1326 = vpack.c.b16 %v1304, %v1302
    %v1327 = vpack.c.b16 %v1307, %v1305
    %v1328 = vpack.c.b16 %v1308, %v1306
    %v1329 = vpack.c.b16 %v1311, %v1309
    %v1330 = vpack.c.b16 %v1312, %v1310
    %v1331 = vpack.c.b16 %v1315, %v1313
    %v1332 = vpack.c.b16 %v1316, %v1314
    %1349 = vmatprep.subr.bf16.mxu0 %v1318
    %1350 = vmatpush1.bf16.msra.mxu0 %v1317
    %1351 = vmatprep.subr.bf16.mxu0 %v1320
    %1352 = vmatpush1.bf16.msra.mxu0 %v1319
    %1353 = vmatprep.subr.bf16.mxu0 %v1322
    %1354 = vmatpush1.bf16.msra.mxu0 %v1321
    %1355 = vmatprep.subr.bf16.mxu0 %v1324
    %1356 = vmatpush1.bf16.msra.mxu0 %v1323
    %1357 = vmatprep.subr.bf16.mxu0 %v1326
    %1358 = vmatpush1.bf16.msra.mxu0 %v1325
    %1359 = vmatprep.subr.bf16.mxu0 %v1328
    %1360 = vmatpush1.bf16.msra.mxu0 %v1327
    %1361 = vmatprep.subr.bf16.mxu0 %v1330
    %1362 = vmatpush1.bf16.msra.mxu0 %v1329
    %1363 = vmatprep.subr.bf16.mxu0 %v1332
    %1364 = vmatpush1.bf16.msra.mxu0 %v1331
    %1365 = vmatprep.subr.bf16.mxu0 0
    %1366 = vmatpush1.bf16.msra.mxu0 0
    %1367 = vmatprep.subr.bf16.mxu0 0
    %1368 = vmatpush1.bf16.msra.mxu0 0
    %1369 = vmatprep.subr.bf16.mxu0 0
    %1370 = vmatpush1.bf16.msra.mxu0 0
    %1371 = vmatprep.subr.bf16.mxu0 0
    %1372 = vmatpush1.bf16.msra.mxu0 0
    %1373 = vmatprep.subr.bf16.mxu0 0
    %1374 = vmatpush1.bf16.msra.mxu0 0
    %1375 = vmatprep.subr.bf16.mxu0 0
    %1376 = vmatpush1.bf16.msra.mxu0 0
    %1377 = vmatprep.subr.bf16.mxu0 0
    %1378 = vmatpush1.bf16.msra.mxu0 0
    %1379 = vmatprep.subr.bf16.mxu0 0
    %1380 = vmatpush1.bf16.msra.mxu0 0
    %1381 = vmatprep.mubr.bf16.mxu0 0
    %1382 = vmatmul.mubr.bf16.gmra.mrb[0].mxu0 %v1240
    %v1383 = vpop.f32.mrb[0].mxu0
    %v1384 = vadd.f32 %v1262, %v1383
    %v1385 = vpop.f32.mrb[0].mxu0
    %v1386 = vadd.f32 %v1266, %v1385
    %v1387 = vpop.f32.mrb[0].mxu0
    %v1388 = vadd.f32 %v1262, %v1387
    %v1389 = vpop.f32.mrb[0].mxu0
    %v1390 = vadd.f32 %v1266, %v1389
    %1391 = vdwg.mxu0
    %v1392 = vmax.f32 %v1384, 0.0
    %v1393 = vmax.f32 %v1386, 0.0
    %v1394 = vmax.f32 %v1388, 0.0
    %v1395 = vmax.f32 %v1390, 0.0
    %v1396 = vpack.c.bf16 %v1394, %v1392
    %v1397 = vpack.c.bf16 %v1395, %v1393
    %v1398 = vld [vmem:[#allocation6] sm:$0xff]
    %v1399 = vld [vmem:[#allocation6 + $0x8] sm:$0xff]
    %v1400 = vld [vmem:[#allocation6 + $0x10] sm:$0xff]
    %v1401 = vld [vmem:[#allocation6 + $0x18] sm:$0xf]
    %v1402 = vld [vmem:[#allocation6 + $0x1c] sm:$0xff]
    %v1403 = vld [vmem:[#allocation6 + $0x24] sm:$0xff]
    %v1404 = vld [vmem:[#allocation6 + $0x2c] sm:$0xff]
    %v1405 = vld [vmem:[#allocation6 + $0x34] sm:$0xf]
    %v1406 = vld [vmem:[#allocation6 + $0x38] sm:$0xff]
    %v1407 = vld [vmem:[#allocation6 + $0x40] sm:$0xff]
    %v1408 = vld [vmem:[#allocation6 + $0x48] sm:$0xff]
    %v1409 = vld [vmem:[#allocation6 + $0x50] sm:$0xf]
    %v1410 = vld [vmem:[#allocation6 + $0x54] sm:$0xff]
    %v1411 = vld [vmem:[#allocation6 + $0x5c] sm:$0xff]
    %v1412 = vld [vmem:[#allocation6 + $0x64] sm:$0xff]
    %v1413 = vld [vmem:[#allocation6 + $0x6c] sm:$0xf]
    %v1414 = vld [vmem:[#allocation6 + $0x70] sm:$0xff]
    %v1415 = vld [vmem:[#allocation6 + $0x78] sm:$0xff]
    %v1416 = vld [vmem:[#allocation6 + $0x80] sm:$0xff]
    %v1417 = vld [vmem:[#allocation6 + $0x88] sm:$0xf]
    %v1418 = vld [vmem:[#allocation6 + $0x8c] sm:$0xff]
    %v1419 = vld [vmem:[#allocation6 + $0x94] sm:$0xff]
    %v1420 = vld [vmem:[#allocation6 + $0x9c] sm:$0xff]
    %v1421 = vld [vmem:[#allocation6 + $0xa4] sm:$0xf]
    %v1422 = vld [vmem:[#allocation6 + $0xa8] sm:$0xff]
    %v1423 = vld [vmem:[#allocation6 + $0xb0] sm:$0xff]
    %v1424 = vld [vmem:[#allocation6 + $0xb8] sm:$0xff]
    %v1425 = vld [vmem:[#allocation6 + $0xc0] sm:$0xf]
    %v1426 = vld [vmem:[#allocation6 + $0xc4] sm:$0xff]
    %v1427 = vld [vmem:[#allocation6 + $0xcc] sm:$0xff]
    %v1428 = vld [vmem:[#allocation6 + $0xd4] sm:$0xff]
    %v1429 = vld [vmem:[#allocation6 + $0xdc] sm:$0xf]
    %v1430 = vld [vmem:[#allocation6 + $0xe0] sm:$0xff]
    %v1431 = vld [vmem:[#allocation6 + $0xe8] sm:$0xff]
    %v1432 = vld [vmem:[#allocation6 + $0xf0] sm:$0xff]
    %v1433 = vld [vmem:[#allocation6 + $0xf8] sm:$0xf]
    %v1434 = vld [vmem:[#allocation6 + $0xfc] sm:$0xff]
    %v1435 = vld [vmem:[#allocation6 + $0x104] sm:$0xff]
    %v1436 = vld [vmem:[#allocation6 + $0x10c] sm:$0xff]
    %v1437 = vld [vmem:[#allocation6 + $0x114] sm:$0xf]
    %v1438 = vld [vmem:[#allocation6 + $0x118] sm:$0xff]
    %v1439 = vld [vmem:[#allocation6 + $0x120] sm:$0xff]
    %v1440 = vld [vmem:[#allocation6 + $0x128] sm:$0xff]
    %v1441 = vld [vmem:[#allocation6 + $0x130] sm:$0xf]
    %v1442 = vld [vmem:[#allocation6 + $0x134] sm:$0xff]
    %v1443 = vld [vmem:[#allocation6 + $0x13c] sm:$0xff]
    %v1444 = vld [vmem:[#allocation6 + $0x144] sm:$0xff]
    %v1445 = vld [vmem:[#allocation6 + $0x14c] sm:$0xf]
    %v1446 = vld [vmem:[#allocation6 + $0x150] sm:$0xff]
    %v1447 = vld [vmem:[#allocation6 + $0x158] sm:$0xff]
    %v1448 = vld [vmem:[#allocation6 + $0x160] sm:$0xff]
    %v1449 = vld [vmem:[#allocation6 + $0x168] sm:$0xf]
    %v1450 = vld [vmem:[#allocation6 + $0x16c] sm:$0xff]
    %v1451 = vld [vmem:[#allocation6 + $0x174] sm:$0xff]
    %v1452 = vld [vmem:[#allocation6 + $0x17c] sm:$0xff]
    %v1453 = vld [vmem:[#allocation6 + $0x184] sm:$0xf]
    %v1454 = vld [vmem:[#allocation6 + $0x188] sm:$0xff]
    %v1455 = vld [vmem:[#allocation6 + $0x190] sm:$0xff]
    %v1456 = vld [vmem:[#allocation6 + $0x198] sm:$0xff]
    %v1457 = vld [vmem:[#allocation6 + $0x1a0] sm:$0xf]
    %v1458 = vld [vmem:[#allocation6 + $0x1a4] sm:$0xff]
    %v1459 = vld [vmem:[#allocation6 + $0x1ac] sm:$0xff]
    %v1460 = vld [vmem:[#allocation6 + $0x1b4] sm:$0xff]
    %v1461 = vld [vmem:[#allocation6 + $0x1bc] sm:$0xf]
    %v1462 = vld [vmem:[#allocation6 + $0x1c0] sm:$0xff]
    %v1463 = vld [vmem:[#allocation6 + $0x1c8] sm:$0xff]
    %v1464 = vld [vmem:[#allocation6 + $0x1d0] sm:$0xff]
    %v1465 = vld [vmem:[#allocation6 + $0x1d8] sm:$0xf]
    %v1466 = vld [vmem:[#allocation6 + $0x1dc] sm:$0xff]
    %v1467 = vld [vmem:[#allocation6 + $0x1e4] sm:$0xff]
    %v1468 = vld [vmem:[#allocation6 + $0x1ec] sm:$0xff]
    %v1469 = vld [vmem:[#allocation6 + $0x1f4] sm:$0xf]
    %v1470 = vld [vmem:[#allocation6 + $0x1f8] sm:$0xff]
    %v1471 = vld [vmem:[#allocation6 + $0x200] sm:$0xff]
    %v1472 = vld [vmem:[#allocation6 + $0x208] sm:$0xff]
    %v1473 = vld [vmem:[#allocation6 + $0x210] sm:$0xf]
    %v1474 = vld [vmem:[#allocation6 + $0x214] sm:$0xff]
    %v1475 = vld [vmem:[#allocation6 + $0x21c] sm:$0xff]
    %v1476 = vld [vmem:[#allocation6 + $0x224] sm:$0xff]
    %v1477 = vld [vmem:[#allocation6 + $0x22c] sm:$0xf]
    %v1478 = vld [vmem:[#allocation6 + $0x230] sm:$0xff]
    %v1479 = vld [vmem:[#allocation6 + $0x238] sm:$0xff]
    %v1480 = vld [vmem:[#allocation6 + $0x240] sm:$0xff]
    %v1481 = vld [vmem:[#allocation6 + $0x248] sm:$0xf]
    %v1482 = vld [vmem:[#allocation6 + $0x24c] sm:$0xff]
    %v1483 = vld [vmem:[#allocation6 + $0x254] sm:$0xff]
    %v1484 = vld [vmem:[#allocation6 + $0x25c] sm:$0xff]
    %v1485 = vld [vmem:[#allocation6 + $0x264] sm:$0xf]
    %v1486 = vld [vmem:[#allocation6 + $0x268] sm:$0xff]
    %v1487 = vld [vmem:[#allocation6 + $0x270] sm:$0xff]
    %v1488 = vld [vmem:[#allocation6 + $0x278] sm:$0xff]
    %v1489 = vld [vmem:[#allocation6 + $0x280] sm:$0xf]
    %v1490 = vld [vmem:[#allocation6 + $0x284] sm:$0xff]
    %v1491 = vld [vmem:[#allocation6 + $0x28c] sm:$0xff]
    %v1492 = vld [vmem:[#allocation6 + $0x294] sm:$0xff]
    %v1493 = vld [vmem:[#allocation6 + $0x29c] sm:$0xf]
    %v1494 = vld [vmem:[#allocation6 + $0x2a0] sm:$0xff]
    %v1495 = vld [vmem:[#allocation6 + $0x2a8] sm:$0xff]
    %v1496 = vld [vmem:[#allocation6 + $0x2b0] sm:$0xff]
    %v1497 = vld [vmem:[#allocation6 + $0x2b8] sm:$0xf]
    %v1498 = vld [vmem:[#allocation6 + $0x2bc] sm:$0xff]
    %v1499 = vld [vmem:[#allocation6 + $0x2c4] sm:$0xff]
    %v1500 = vld [vmem:[#allocation6 + $0x2cc] sm:$0xff]
    %v1501 = vld [vmem:[#allocation6 + $0x2d4] sm:$0xf]
    %v1502 = vld [vmem:[#allocation6 + $0x2d8] sm:$0xff]
    %v1503 = vld [vmem:[#allocation6 + $0x2e0] sm:$0xff]
    %v1504 = vld [vmem:[#allocation6 + $0x2e8] sm:$0xff]
    %v1505 = vld [vmem:[#allocation6 + $0x2f0] sm:$0xf]
    %v1506 = vld [vmem:[#allocation6 + $0x2f4] sm:$0xff]
    %v1507 = vld [vmem:[#allocation6 + $0x2fc] sm:$0xff]
    %v1508 = vld [vmem:[#allocation6 + $0x304] sm:$0xff]
    %v1509 = vld [vmem:[#allocation6 + $0x30c] sm:$0xf]
    %v1510 = vld [vmem:[#allocation6 + $0x310] sm:$0xff]
    %v1511 = vld [vmem:[#allocation6 + $0x318] sm:$0xff]
    %v1512 = vld [vmem:[#allocation6 + $0x320] sm:$0xff]
    %v1513 = vld [vmem:[#allocation6 + $0x328] sm:$0xf]
    %v1514 = vld [vmem:[#allocation6 + $0x32c] sm:$0xff]
    %v1515 = vld [vmem:[#allocation6 + $0x334] sm:$0xff]
    %v1516 = vld [vmem:[#allocation6 + $0x33c] sm:$0xff]
    %v1517 = vld [vmem:[#allocation6 + $0x344] sm:$0xf]
    %v1518 = vld [vmem:[#allocation6 + $0x348] sm:$0xff]
    %v1519 = vld [vmem:[#allocation6 + $0x350] sm:$0xff]
    %v1520 = vld [vmem:[#allocation6 + $0x358] sm:$0xff]
    %v1521 = vld [vmem:[#allocation6 + $0x360] sm:$0xf]
    %v1522 = vld [vmem:[#allocation6 + $0x364] sm:$0xff]
    %v1523 = vld [vmem:[#allocation6 + $0x36c] sm:$0xff]
    %v1524 = vld [vmem:[#allocation6 + $0x374] sm:$0xff]
    %v1525 = vld [vmem:[#allocation6 + $0x37c] sm:$0xf]
    %v1526 = vld [vmem:[%s9] sm:$0xff]
    %v1528 = vlaneseq
    %v1529 = vshrl.u32 %v1528, 7
    %v1530 = vsub.s32 0, %v1529
    %v1531 = vrot.slane %v1526, %v1530
    %v1532 = vlaneseq
    %v1533 = vshrl.u32 %v1532, 7
    %v1534 = vsub.s32 1, %v1533
    %v1535 = vrot.slane %v1526, %v1534
    %v1536 = vlaneseq
    %v1537 = vshrl.u32 %v1536, 7
    %v1538 = vsub.s32 2, %v1537
    %v1539 = vrot.slane %v1526, %v1538
    %v1540 = vlaneseq
    %v1541 = vshrl.u32 %v1540, 7
    %v1542 = vsub.s32 3, %v1541
    %v1543 = vrot.slane %v1526, %v1542
    %v1544 = vlaneseq
    %v1545 = vshrl.u32 %v1544, 7
    %v1546 = vsub.s32 4, %v1545
    %v1547 = vrot.slane %v1526, %v1546
    %v1548 = vlaneseq
    %v1549 = vshrl.u32 %v1548, 7
    %v1550 = vsub.s32 5, %v1549
    %v1551 = vrot.slane %v1526, %v1550
    %v1552 = vlaneseq
    %v1553 = vshrl.u32 %v1552, 7
    %v1554 = vsub.s32 6, %v1553
    %v1555 = vrot.slane %v1526, %v1554
    %v1691 = vunpack.c.l.b16 %v1398
    %v1692 = vunpack.c.h.b16 %v1398
    %v1693 = vunpack.c.l.b16 %v1399
    %v1694 = vunpack.c.h.b16 %v1399
    %v1695 = vunpack.c.l.b16 %v1400
    %v1696 = vunpack.c.h.b16 %v1400
    %v1697 = vunpack.c.l.b16 %v1401
    %v1698 = vunpack.c.l.b16 %v1402
    %v1699 = vunpack.c.h.b16 %v1402
    %v1700 = vunpack.c.l.b16 %v1403
    %v1701 = vunpack.c.h.b16 %v1403
    %v1702 = vunpack.c.l.b16 %v1404
    %v1703 = vunpack.c.h.b16 %v1404
    %v1704 = vunpack.c.l.b16 %v1405
    %v1705 = vunpack.c.l.b16 %v1406
    %v1706 = vunpack.c.h.b16 %v1406
    %v1707 = vunpack.c.l.b16 %v1407
    %v1708 = vunpack.c.h.b16 %v1407
    %v1709 = vunpack.c.l.b16 %v1408
    %v1710 = vunpack.c.h.b16 %v1408
    %v1711 = vunpack.c.l.b16 %v1409
    %v1712 = vunpack.c.l.b16 %v1410
    %v1713 = vunpack.c.h.b16 %v1410
    %v1714 = vunpack.c.l.b16 %v1411
    %v1715 = vunpack.c.h.b16 %v1411
    %v1716 = vunpack.c.l.b16 %v1412
    %v1717 = vunpack.c.h.b16 %v1412
    %v1718 = vunpack.c.l.b16 %v1413
    %v1719 = vunpack.c.l.b16 %v1414
    %v1720 = vunpack.c.h.b16 %v1414
    %v1721 = vunpack.c.l.b16 %v1415
    %v1722 = vunpack.c.h.b16 %v1415
    %v1723 = vunpack.c.l.b16 %v1416
    %v1724 = vunpack.c.h.b16 %v1416
    %v1725 = vunpack.c.l.b16 %v1417
    %v1726 = vunpack.c.l.b16 %v1418
    %v1727 = vunpack.c.h.b16 %v1418
    %v1728 = vunpack.c.l.b16 %v1419
    %v1729 = vunpack.c.h.b16 %v1419
    %v1730 = vunpack.c.l.b16 %v1420
    %v1731 = vunpack.c.h.b16 %v1420
    %v1732 = vunpack.c.l.b16 %v1421
    %v1733 = vunpack.c.l.b16 %v1422
    %v1734 = vunpack.c.h.b16 %v1422
    %v1735 = vunpack.c.l.b16 %v1423
    %v1736 = vunpack.c.h.b16 %v1423
    %v1737 = vunpack.c.l.b16 %v1424
    %v1738 = vunpack.c.h.b16 %v1424
    %v1739 = vunpack.c.l.b16 %v1425
    %v1740 = vunpack.c.l.b16 %v1426
    %v1741 = vunpack.c.h.b16 %v1426
    %v1742 = vunpack.c.l.b16 %v1427
    %v1743 = vunpack.c.h.b16 %v1427
    %v1744 = vunpack.c.l.b16 %v1428
    %v1745 = vunpack.c.h.b16 %v1428
    %v1746 = vunpack.c.l.b16 %v1429
    %v1747 = vunpack.c.l.b16 %v1430
    %v1748 = vunpack.c.h.b16 %v1430
    %v1749 = vunpack.c.l.b16 %v1431
    %v1750 = vunpack.c.h.b16 %v1431
    %v1751 = vunpack.c.l.b16 %v1432
    %v1752 = vunpack.c.h.b16 %v1432
    %v1753 = vunpack.c.l.b16 %v1433
    %v1754 = vunpack.c.l.b16 %v1434
    %v1755 = vunpack.c.h.b16 %v1434
    %v1756 = vunpack.c.l.b16 %v1435
    %v1757 = vunpack.c.h.b16 %v1435
    %v1758 = vunpack.c.l.b16 %v1436
    %v1759 = vunpack.c.h.b16 %v1436
    %v1760 = vunpack.c.l.b16 %v1437
    %v1761 = vunpack.c.l.b16 %v1438
    %v1762 = vunpack.c.h.b16 %v1438
    %v1763 = vunpack.c.l.b16 %v1439
    %v1764 = vunpack.c.h.b16 %v1439
    %v1765 = vunpack.c.l.b16 %v1440
    %v1766 = vunpack.c.h.b16 %v1440
    %v1767 = vunpack.c.l.b16 %v1441
    %v1768 = vunpack.c.l.b16 %v1442
    %v1769 = vunpack.c.h.b16 %v1442
    %v1770 = vunpack.c.l.b16 %v1443
    %v1771 = vunpack.c.h.b16 %v1443
    %v1772 = vunpack.c.l.b16 %v1444
    %v1773 = vunpack.c.h.b16 %v1444
    %v1774 = vunpack.c.l.b16 %v1445
    %v1775 = vunpack.c.l.b16 %v1446
    %v1776 = vunpack.c.h.b16 %v1446
    %v1777 = vunpack.c.l.b16 %v1447
    %v1778 = vunpack.c.h.b16 %v1447
    %v1779 = vunpack.c.l.b16 %v1448
    %v1780 = vunpack.c.h.b16 %v1448
    %v1781 = vunpack.c.l.b16 %v1449
    %v1782 = vunpack.c.l.b16 %v1450
    %v1783 = vunpack.c.h.b16 %v1450
    %v1784 = vunpack.c.l.b16 %v1451
    %v1785 = vunpack.c.h.b16 %v1451
    %v1786 = vunpack.c.l.b16 %v1452
    %v1787 = vunpack.c.h.b16 %v1452
    %v1788 = vunpack.c.l.b16 %v1453
    %v1789 = vunpack.c.l.b16 %v1454
    %v1790 = vunpack.c.h.b16 %v1454
    %v1791 = vunpack.c.l.b16 %v1455
    %v1792 = vunpack.c.h.b16 %v1455
    %v1793 = vunpack.c.l.b16 %v1456
    %v1794 = vunpack.c.h.b16 %v1456
    %v1795 = vunpack.c.l.b16 %v1457
    %v1796 = vunpack.c.l.b16 %v1458
    %v1797 = vunpack.c.h.b16 %v1458
    %v1798 = vunpack.c.l.b16 %v1459
    %v1799 = vunpack.c.h.b16 %v1459
    %v1800 = vunpack.c.l.b16 %v1460
    %v1801 = vunpack.c.h.b16 %v1460
    %v1802 = vunpack.c.l.b16 %v1461
    %v1803 = vunpack.c.l.b16 %v1462
    %v1804 = vunpack.c.h.b16 %v1462
    %v1805 = vunpack.c.l.b16 %v1463
    %v1806 = vunpack.c.h.b16 %v1463
    %v1807 = vunpack.c.l.b16 %v1464
    %v1808 = vunpack.c.h.b16 %v1464
    %v1809 = vunpack.c.l.b16 %v1465
    %v1810 = vunpack.c.l.b16 %v1466
    %v1811 = vunpack.c.h.b16 %v1466
    %v1812 = vunpack.c.l.b16 %v1467
    %v1813 = vunpack.c.h.b16 %v1467
    %v1814 = vunpack.c.l.b16 %v1468
    %v1815 = vunpack.c.h.b16 %v1468
    %v1816 = vunpack.c.l.b16 %v1469
    %v1817 = vunpack.c.l.b16 %v1470
    %v1818 = vunpack.c.h.b16 %v1470
    %v1819 = vunpack.c.l.b16 %v1471
    %v1820 = vunpack.c.h.b16 %v1471
    %v1821 = vunpack.c.l.b16 %v1472
    %v1822 = vunpack.c.h.b16 %v1472
    %v1823 = vunpack.c.l.b16 %v1473
    %v1824 = vunpack.c.l.b16 %v1474
    %v1825 = vunpack.c.h.b16 %v1474
    %v1826 = vunpack.c.l.b16 %v1475
    %v1827 = vunpack.c.h.b16 %v1475
    %v1828 = vunpack.c.l.b16 %v1476
    %v1829 = vunpack.c.h.b16 %v1476
    %v1830 = vunpack.c.l.b16 %v1477
    %v1831 = vunpack.c.l.b16 %v1478
    %v1832 = vunpack.c.h.b16 %v1478
    %v1833 = vunpack.c.l.b16 %v1479
    %v1834 = vunpack.c.h.b16 %v1479
    %v1835 = vunpack.c.l.b16 %v1480
    %v1836 = vunpack.c.h.b16 %v1480
    %v1837 = vunpack.c.l.b16 %v1481
    %v1838 = vunpack.c.l.b16 %v1482
    %v1839 = vunpack.c.h.b16 %v1482
    %v1840 = vunpack.c.l.b16 %v1483
    %v1841 = vunpack.c.h.b16 %v1483
    %v1842 = vunpack.c.l.b16 %v1484
    %v1843 = vunpack.c.h.b16 %v1484
    %v1844 = vunpack.c.l.b16 %v1485
    %v1845 = vunpack.c.l.b16 %v1486
    %v1846 = vunpack.c.h.b16 %v1486
    %v1847 = vunpack.c.l.b16 %v1487
    %v1848 = vunpack.c.h.b16 %v1487
    %v1849 = vunpack.c.l.b16 %v1488
    %v1850 = vunpack.c.h.b16 %v1488
    %v1851 = vunpack.c.l.b16 %v1489
    %v1852 = vunpack.c.l.b16 %v1490
    %v1853 = vunpack.c.h.b16 %v1490
    %v1854 = vunpack.c.l.b16 %v1491
    %v1855 = vunpack.c.h.b16 %v1491
    %v1856 = vunpack.c.l.b16 %v1492
    %v1857 = vunpack.c.h.b16 %v1492
    %v1858 = vunpack.c.l.b16 %v1493
    %v1859 = vunpack.c.l.b16 %v1494
    %v1860 = vunpack.c.h.b16 %v1494
    %v1861 = vunpack.c.l.b16 %v1495
    %v1862 = vunpack.c.h.b16 %v1495
    %v1863 = vunpack.c.l.b16 %v1496
    %v1864 = vunpack.c.h.b16 %v1496
    %v1865 = vunpack.c.l.b16 %v1497
    %v1866 = vunpack.c.l.b16 %v1498
    %v1867 = vunpack.c.h.b16 %v1498
    %v1868 = vunpack.c.l.b16 %v1499
    %v1869 = vunpack.c.h.b16 %v1499
    %v1870 = vunpack.c.l.b16 %v1500
    %v1871 = vunpack.c.h.b16 %v1500
    %v1872 = vunpack.c.l.b16 %v1501
    %v1873 = vunpack.c.l.b16 %v1502
    %v1874 = vunpack.c.h.b16 %v1502
    %v1875 = vunpack.c.l.b16 %v1503
    %v1876 = vunpack.c.h.b16 %v1503
    %v1877 = vunpack.c.l.b16 %v1504
    %v1878 = vunpack.c.h.b16 %v1504
    %v1879 = vunpack.c.l.b16 %v1505
    %v1880 = vunpack.c.l.b16 %v1506
    %v1881 = vunpack.c.h.b16 %v1506
    %v1882 = vunpack.c.l.b16 %v1507
    %v1883 = vunpack.c.h.b16 %v1507
    %v1884 = vunpack.c.l.b16 %v1508
    %v1885 = vunpack.c.h.b16 %v1508
    %v1886 = vunpack.c.l.b16 %v1509
    %v1887 = vunpack.c.l.b16 %v1510
    %v1888 = vunpack.c.h.b16 %v1510
    %v1889 = vunpack.c.l.b16 %v1511
    %v1890 = vunpack.c.h.b16 %v1511
    %v1891 = vunpack.c.l.b16 %v1512
    %v1892 = vunpack.c.h.b16 %v1512
    %v1893 = vunpack.c.l.b16 %v1513
    %v1894 = vunpack.c.l.b16 %v1514
    %v1895 = vunpack.c.h.b16 %v1514
    %v1896 = vunpack.c.l.b16 %v1515
    %v1897 = vunpack.c.h.b16 %v1515
    %v1898 = vunpack.c.l.b16 %v1516
    %v1899 = vunpack.c.h.b16 %v1516
    %v1900 = vunpack.c.l.b16 %v1517
    %v1901 = vunpack.c.l.b16 %v1518
    %v1902 = vunpack.c.h.b16 %v1518
    %v1903 = vunpack.c.l.b16 %v1519
    %v1904 = vunpack.c.h.b16 %v1519
    %v1905 = vunpack.c.l.b16 %v1520
    %v1906 = vunpack.c.h.b16 %v1520
    %v1907 = vunpack.c.l.b16 %v1521
    %v1908 = vunpack.c.l.b16 %v1522
    %v1909 = vunpack.c.h.b16 %v1522
    %v1910 = vunpack.c.l.b16 %v1523
    %v1911 = vunpack.c.h.b16 %v1523
    %v1912 = vunpack.c.l.b16 %v1524
    %v1913 = vunpack.c.h.b16 %v1524
    %v1914 = vunpack.c.l.b16 %v1525
    %v1915 = vpack.c.b16 %v1698, %v1691
    %v1916 = vpack.c.b16 %v1699, %v1692
    %v1917 = vpack.c.b16 %v1700, %v1693
    %v1918 = vpack.c.b16 %v1701, %v1694
    %v1919 = vpack.c.b16 %v1702, %v1695
    %v1920 = vpack.c.b16 %v1703, %v1696
    %v1921 = vpack.c.b16 %v1704, %v1697
    %v1922 = vpack.c.b16 %v1712, %v1705
    %v1923 = vpack.c.b16 %v1713, %v1706
    %v1924 = vpack.c.b16 %v1714, %v1707
    %v1925 = vpack.c.b16 %v1715, %v1708
    %v1926 = vpack.c.b16 %v1716, %v1709
    %v1927 = vpack.c.b16 %v1717, %v1710
    %v1928 = vpack.c.b16 %v1718, %v1711
    %v1929 = vpack.c.b16 %v1726, %v1719
    %v1930 = vpack.c.b16 %v1727, %v1720
    %v1931 = vpack.c.b16 %v1728, %v1721
    %v1932 = vpack.c.b16 %v1729, %v1722
    %v1933 = vpack.c.b16 %v1730, %v1723
    %v1934 = vpack.c.b16 %v1731, %v1724
    %v1935 = vpack.c.b16 %v1732, %v1725
    %v1936 = vpack.c.b16 %v1740, %v1733
    %v1937 = vpack.c.b16 %v1741, %v1734
    %v1938 = vpack.c.b16 %v1742, %v1735
    %v1939 = vpack.c.b16 %v1743, %v1736
    %v1940 = vpack.c.b16 %v1744, %v1737
    %v1941 = vpack.c.b16 %v1745, %v1738
    %v1942 = vpack.c.b16 %v1746, %v1739
    %v1943 = vpack.c.b16 %v1754, %v1747
    %v1944 = vpack.c.b16 %v1755, %v1748
    %v1945 = vpack.c.b16 %v1756, %v1749
    %v1946 = vpack.c.b16 %v1757, %v1750
    %v1947 = vpack.c.b16 %v1758, %v1751
    %v1948 = vpack.c.b16 %v1759, %v1752
    %v1949 = vpack.c.b16 %v1760, %v1753
    %v1950 = vpack.c.b16 %v1768, %v1761
    %v1951 = vpack.c.b16 %v1769, %v1762
    %v1952 = vpack.c.b16 %v1770, %v1763
    %v1953 = vpack.c.b16 %v1771, %v1764
    %v1954 = vpack.c.b16 %v1772, %v1765
    %v1955 = vpack.c.b16 %v1773, %v1766
    %v1956 = vpack.c.b16 %v1774, %v1767
    %v1957 = vpack.c.b16 %v1782, %v1775
    %v1958 = vpack.c.b16 %v1783, %v1776
    %v1959 = vpack.c.b16 %v1784, %v1777
    %v1960 = vpack.c.b16 %v1785, %v1778
    %v1961 = vpack.c.b16 %v1786, %v1779
    %v1962 = vpack.c.b16 %v1787, %v1780
    %v1963 = vpack.c.b16 %v1788, %v1781
    %v1964 = vpack.c.b16 %v1796, %v1789
    %v1965 = vpack.c.b16 %v1797, %v1790
    %v1966 = vpack.c.b16 %v1798, %v1791
    %v1967 = vpack.c.b16 %v1799, %v1792
    %v1968 = vpack.c.b16 %v1800, %v1793
    %v1969 = vpack.c.b16 %v1801, %v1794
    %v1970 = vpack.c.b16 %v1802, %v1795
    %v1971 = vpack.c.b16 %v1810, %v1803
    %v1972 = vpack.c.b16 %v1811, %v1804
    %v1973 = vpack.c.b16 %v1812, %v1805
    %v1974 = vpack.c.b16 %v1813, %v1806
    %v1975 = vpack.c.b16 %v1814, %v1807
    %v1976 = vpack.c.b16 %v1815, %v1808
    %v1977 = vpack.c.b16 %v1816, %v1809
    %v1978 = vpack.c.b16 %v1824, %v1817
    %v1979 = vpack.c.b16 %v1825, %v1818
    %v1980 = vpack.c.b16 %v1826, %v1819
    %v1981 = vpack.c.b16 %v1827, %v1820
    %v1982 = vpack.c.b16 %v1828, %v1821
    %v1983 = vpack.c.b16 %v1829, %v1822
    %v1984 = vpack.c.b16 %v1830, %v1823
    %v1985 = vpack.c.b16 %v1838, %v1831
    %v1986 = vpack.c.b16 %v1839, %v1832
    %v1987 = vpack.c.b16 %v1840, %v1833
    %v1988 = vpack.c.b16 %v1841, %v1834
    %v1989 = vpack.c.b16 %v1842, %v1835
    %v1990 = vpack.c.b16 %v1843, %v1836
    %v1991 = vpack.c.b16 %v1844, %v1837
    %v1992 = vpack.c.b16 %v1852, %v1845
    %v1993 = vpack.c.b16 %v1853, %v1846
    %v1994 = vpack.c.b16 %v1854, %v1847
    %v1995 = vpack.c.b16 %v1855, %v1848
    %v1996 = vpack.c.b16 %v1856, %v1849
    %v1997 = vpack.c.b16 %v1857, %v1850
    %v1998 = vpack.c.b16 %v1858, %v1851
    %v1999 = vpack.c.b16 %v1866, %v1859
    %v2000 = vpack.c.b16 %v1867, %v1860
    %v2001 = vpack.c.b16 %v1868, %v1861
    %v2002 = vpack.c.b16 %v1869, %v1862
    %v2003 = vpack.c.b16 %v1870, %v1863
    %v2004 = vpack.c.b16 %v1871, %v1864
    %v2005 = vpack.c.b16 %v1872, %v1865
    %v2006 = vpack.c.b16 %v1880, %v1873
    %v2007 = vpack.c.b16 %v1881, %v1874
    %v2008 = vpack.c.b16 %v1882, %v1875
    %v2009 = vpack.c.b16 %v1883, %v1876
    %v2010 = vpack.c.b16 %v1884, %v1877
    %v2011 = vpack.c.b16 %v1885, %v1878
    %v2012 = vpack.c.b16 %v1886, %v1879
    %v2013 = vpack.c.b16 %v1894, %v1887
    %v2014 = vpack.c.b16 %v1895, %v1888
    %v2015 = vpack.c.b16 %v1896, %v1889
    %v2016 = vpack.c.b16 %v1897, %v1890
    %v2017 = vpack.c.b16 %v1898, %v1891
    %v2018 = vpack.c.b16 %v1899, %v1892
    %v2019 = vpack.c.b16 %v1900, %v1893
    %v2020 = vpack.c.b16 %v1908, %v1901
    %v2021 = vpack.c.b16 %v1909, %v1902
    %v2022 = vpack.c.b16 %v1910, %v1903
    %v2023 = vpack.c.b16 %v1911, %v1904
    %v2024 = vpack.c.b16 %v1912, %v1905
    %v2025 = vpack.c.b16 %v1913, %v1906
    %v2026 = vpack.c.b16 %v1914, %v1907
    %2139 = vmatprep.subr.bf16.mxu0 %v1916
    %2140 = vmatpush1.bf16.msra.mxu0 %v1915
    %2141 = vmatprep.subr.bf16.mxu0 %v1923
    %2142 = vmatpush1.bf16.msra.mxu0 %v1922
    %2143 = vmatprep.subr.bf16.mxu0 %v1930
    %2144 = vmatpush1.bf16.msra.mxu0 %v1929
    %2145 = vmatprep.subr.bf16.mxu0 %v1937
    %2146 = vmatpush1.bf16.msra.mxu0 %v1936
    %2147 = vmatprep.subr.bf16.mxu0 %v1944
    %2148 = vmatpush1.bf16.msra.mxu0 %v1943
    %2149 = vmatprep.subr.bf16.mxu0 %v1951
    %2150 = vmatpush1.bf16.msra.mxu0 %v1950
    %2151 = vmatprep.subr.bf16.mxu0 %v1958
    %2152 = vmatpush1.bf16.msra.mxu0 %v1957
    %2153 = vmatprep.subr.bf16.mxu0 %v1965
    %2154 = vmatpush1.bf16.msra.mxu0 %v1964
    %2155 = vmatprep.subr.bf16.mxu0 %v1972
    %2156 = vmatpush1.bf16.msra.mxu0 %v1971
    %2157 = vmatprep.subr.bf16.mxu0 %v1979
    %2158 = vmatpush1.bf16.msra.mxu0 %v1978
    %2159 = vmatprep.subr.bf16.mxu0 %v1986
    %2160 = vmatpush1.bf16.msra.mxu0 %v1985
    %2161 = vmatprep.subr.bf16.mxu0 %v1993
    %2162 = vmatpush1.bf16.msra.mxu0 %v1992
    %2163 = vmatprep.subr.bf16.mxu0 %v2000
    %2164 = vmatpush1.bf16.msra.mxu0 %v1999
    %2165 = vmatprep.subr.bf16.mxu0 %v2007
    %2166 = vmatpush1.bf16.msra.mxu0 %v2006
    %2167 = vmatprep.subr.bf16.mxu0 %v2014
    %2168 = vmatpush1.bf16.msra.mxu0 %v2013
    %2169 = vmatprep.subr.bf16.mxu0 %v2021
    %2170 = vmatpush1.bf16.msra.mxu0 %v2020
    %2171 = vmatprep.mubr.bf16.mxu0 %v1397
    %2172 = vmatmul.mubr.bf16.gmra.mrb[0].mxu0 %v1396
    %v2173 = vpop.f32.mrb[0].mxu0
    %v2174 = vadd.f32 %v1531, %v2173
    %v2175 = vpop.f32.mrb[0].mxu0
    %v2176 = vadd.f32 %v1535, %v2175
    %v2177 = vpop.f32.mrb[0].mxu0
    %v2178 = vadd.f32 %v1531, %v2177
    %v2179 = vpop.f32.mrb[0].mxu0
    %v2180 = vadd.f32 %v1535, %v2179
    %2181 = vdwg.mxu0
    %2182 = vmatprep.subr.bf16.mxu0 %v1918
    %2183 = vmatpush1.bf16.msra.mxu0 %v1917
    %2184 = vmatprep.subr.bf16.mxu0 %v1925
    %2185 = vmatpush1.bf16.msra.mxu0 %v1924
    %2186 = vmatprep.subr.bf16.mxu0 %v1932
    %2187 = vmatpush1.bf16.msra.mxu0 %v1931
    %2188 = vmatprep.subr.bf16.mxu0 %v1939
    %2189 = vmatpush1.bf16.msra.mxu0 %v1938
    %2190 = vmatprep.subr.bf16.mxu0 %v1946
    %2191 = vmatpush1.bf16.msra.mxu0 %v1945
    %2192 = vmatprep.subr.bf16.mxu0 %v1953
    %2193 = vmatpush1.bf16.msra.mxu0 %v1952
    %2194 = vmatprep.subr.bf16.mxu0 %v1960
    %2195 = vmatpush1.bf16.msra.mxu0 %v1959
    %2196 = vmatprep.subr.bf16.mxu0 %v1967
    %2197 = vmatpush1.bf16.msra.mxu0 %v1966
    %2198 = vmatprep.subr.bf16.mxu0 %v1974
    %2199 = vmatpush1.bf16.msra.mxu0 %v1973
    %2200 = vmatprep.subr.bf16.mxu0 %v1981
    %2201 = vmatpush1.bf16.msra.mxu0 %v1980
    %2202 = vmatprep.subr.bf16.mxu0 %v1988
    %2203 = vmatpush1.bf16.msra.mxu0 %v1987
    %2204 = vmatprep.subr.bf16.mxu0 %v1995
    %2205 = vmatpush1.bf16.msra.mxu0 %v1994
    %2206 = vmatprep.subr.bf16.mxu0 %v2002
    %2207 = vmatpush1.bf16.msra.mxu0 %v2001
    %2208 = vmatprep.subr.bf16.mxu0 %v2009
    %2209 = vmatpush1.bf16.msra.mxu0 %v2008
    %2210 = vmatprep.subr.bf16.mxu0 %v2016
    %2211 = vmatpush1.bf16.msra.mxu0 %v2015
    %2212 = vmatprep.subr.bf16.mxu0 %v2023
    %2213 = vmatpush1.bf16.msra.mxu0 %v2022
    %2214 = vmatprep.mubr.bf16.mxu0 %v1397
    %2215 = vmatmul.mubr.bf16.gmra.mrb[0].mxu0 %v1396
    %v2216 = vpop.f32.mrb[0].mxu0
    %v2217 = vadd.f32 %v1539, %v2216
    %v2218 = vpop.f32.mrb[0].mxu0
    %v2219 = vadd.f32 %v1543, %v2218
    %v2220 = vpop.f32.mrb[0].mxu0
    %v2221 = vadd.f32 %v1539, %v2220
    %v2222 = vpop.f32.mrb[0].mxu0
    %v2223 = vadd.f32 %v1543, %v2222
    %2224 = vdwg.mxu0
    %2225 = vmatprep.subr.bf16.mxu0 %v1920
    %2226 = vmatpush1.bf16.msra.mxu0 %v1919
    %2227 = vmatprep.subr.bf16.mxu0 %v1927
    %2228 = vmatpush1.bf16.msra.mxu0 %v1926
    %2229 = vmatprep.subr.bf16.mxu0 %v1934
    %2230 = vmatpush1.bf16.msra.mxu0 %v1933
    %2231 = vmatprep.subr.bf16.mxu0 %v1941
    %2232 = vmatpush1.bf16.msra.mxu0 %v1940
    %2233 = vmatprep.subr.bf16.mxu0 %v1948
    %2234 = vmatpush1.bf16.msra.mxu0 %v1947
    %2235 = vmatprep.subr.bf16.mxu0 %v1955
    %2236 = vmatpush1.bf16.msra.mxu0 %v1954
    %2237 = vmatprep.subr.bf16.mxu0 %v1962
    %2238 = vmatpush1.bf16.msra.mxu0 %v1961
    %2239 = vmatprep.subr.bf16.mxu0 %v1969
    %2240 = vmatpush1.bf16.msra.mxu0 %v1968
    %2241 = vmatprep.subr.bf16.mxu0 %v1976
    %2242 = vmatpush1.bf16.msra.mxu0 %v1975
    %2243 = vmatprep.subr.bf16.mxu0 %v1983
    %2244 = vmatpush1.bf16.msra.mxu0 %v1982
    %2245 = vmatprep.subr.bf16.mxu0 %v1990
    %2246 = vmatpush1.bf16.msra.mxu0 %v1989
    %2247 = vmatprep.subr.bf16.mxu0 %v1997
    %2248 = vmatpush1.bf16.msra.mxu0 %v1996
    %2249 = vmatprep.subr.bf16.mxu0 %v2004
    %2250 = vmatpush1.bf16.msra.mxu0 %v2003
    %2251 = vmatprep.subr.bf16.mxu0 %v2011
    %2252 = vmatpush1.bf16.msra.mxu0 %v2010
    %2253 = vmatprep.subr.bf16.mxu0 %v2018
    %2254 = vmatpush1.bf16.msra.mxu0 %v2017
    %2255 = vmatprep.subr.bf16.mxu0 %v2025
    %2256 = vmatpush1.bf16.msra.mxu0 %v2024
    %2257 = vmatprep.mubr.bf16.mxu0 %v1397
    %2258 = vmatmul.mubr.bf16.gmra.mrb[0].mxu0 %v1396
    %v2259 = vpop.f32.mrb[0].mxu0
    %v2260 = vadd.f32 %v1547, %v2259
    %v2261 = vpop.f32.mrb[0].mxu0
    %v2262 = vadd.f32 %v1551, %v2261
    %v2263 = vpop.f32.mrb[0].mxu0
    %v2264 = vadd.f32 %v1547, %v2263
    %v2265 = vpop.f32.mrb[0].mxu0
    %v2266 = vadd.f32 %v1551, %v2265
    %2267 = vdwg.mxu0
    %2268 = vmatprep.subr.bf16.mxu0 0
    %2269 = vmatpush1.bf16.msra.mxu0 %v1921
    %2270 = vmatprep.subr.bf16.mxu0 0
    %2271 = vmatpush1.bf16.msra.mxu0 %v1928
    %2272 = vmatprep.subr.bf16.mxu0 0
    %2273 = vmatpush1.bf16.msra.mxu0 %v1935
    %2274 = vmatprep.subr.bf16.mxu0 0
    %2275 = vmatpush1.bf16.msra.mxu0 %v1942
    %2276 = vmatprep.subr.bf16.mxu0 0
    %2277 = vmatpush1.bf16.msra.mxu0 %v1949
    %2278 = vmatprep.subr.bf16.mxu0 0
    %2279 = vmatpush1.bf16.msra.mxu0 %v1956
    %2280 = vmatprep.subr.bf16.mxu0 0
    %2281 = vmatpush1.bf16.msra.mxu0 %v1963
    %2282 = vmatprep.subr.bf16.mxu0 0
    %2283 = vmatpush1.bf16.msra.mxu0 %v1970
    %2284 = vmatprep.subr.bf16.mxu0 0
    %2285 = vmatpush1.bf16.msra.mxu0 %v1977
    %2286 = vmatprep.subr.bf16.mxu0 0
    %2287 = vmatpush1.bf16.msra.mxu0 %v1984
    %2288 = vmatprep.subr.bf16.mxu0 0
    %2289 = vmatpush1.bf16.msra.mxu0 %v1991
    %2290 = vmatprep.subr.bf16.mxu0 0
    %2291 = vmatpush1.bf16.msra.mxu0 %v1998
    %2292 = vmatprep.subr.bf16.mxu0 0
    %2293 = vmatpush1.bf16.msra.mxu0 %v2005
    %2294 = vmatprep.subr.bf16.mxu0 0
    %2295 = vmatpush1.bf16.msra.mxu0 %v2012
    %2296 = vmatprep.subr.bf16.mxu0 0
    %2297 = vmatpush1.bf16.msra.mxu0 %v2019
    %2298 = vmatprep.subr.bf16.mxu0 0
    %2299 = vmatpush1.bf16.msra.mxu0 %v2026
    %2300 = vmatprep.mubr.bf16.mxu0 %v1397
    %2301 = vmatmul.mubr.bf16.gmra.mrb[0].mxu0 %v1396
    %v2302 = vpop.f32.mrb[0].mxu0
    %v2303 = vadd.f32 %v1555, %v2302
    %v2304 = vpop.f32.mrb[0].mxu0
    %v2305 = vpop.f32.mrb[0].mxu0
    %v2306 = vadd.f32 %v1555, %v2305
    %v2307 = vpop.f32.mrb[0].mxu0
    %2308 = vdwg.mxu0
    %v2309 = vsub.f32 0.0, %v2174
    %v2310 = vsub.f32 0.0, %v2176
    %v2311 = vsub.f32 0.0, %v2217
    %v2312 = vsub.f32 0.0, %v2219
    %v2313 = vsub.f32 0.0, %v2260
    %v2314 = vsub.f32 0.0, %v2262
    %v2315 = vsub.f32 0.0, %v2303
    %v2316 = vsub.f32 0.0, %v2178
    %v2317 = vsub.f32 0.0, %v2180
    %v2318 = vsub.f32 0.0, %v2221
    %v2319 = vsub.f32 0.0, %v2223
    %v2320 = vsub.f32 0.0, %v2264
    %v2321 = vsub.f32 0.0, %v2266
    %v2322 = vsub.f32 0.0, %v2306
    %v2323 = vmul.f32 %v2309, 1.442695
    %v2324 = vpow.pop %v2323
    %v2325 = vmul.f32 %v2310, 1.442695
    %v2326 = vpow.pop %v2325
    %v2327 = vmul.f32 %v2311, 1.442695
    %v2328 = vpow.pop %v2327
    %v2329 = vmul.f32 %v2312, 1.442695
    %v2330 = vpow.pop %v2329
    %v2331 = vmul.f32 %v2313, 1.442695
    %v2332 = vpow.pop %v2331
    %v2333 = vmul.f32 %v2314, 1.442695
    %v2334 = vpow.pop %v2333
    %v2335 = vmul.f32 %v2315, 1.442695
    %v2336 = vpow.pop %v2335
    %v2337 = vmul.f32 %v2316, 1.442695
    %v2338 = vpow.pop %v2337
    %v2339 = vmul.f32 %v2317, 1.442695
    %v2340 = vpow.pop %v2339
    %v2341 = vmul.f32 %v2318, 1.442695
    %v2342 = vpow.pop %v2341
    %v2343 = vmul.f32 %v2319, 1.442695
    %v2344 = vpow.pop %v2343
    %v2345 = vmul.f32 %v2320, 1.442695
    %v2346 = vpow.pop %v2345
    %v2347 = vmul.f32 %v2321, 1.442695
    %v2348 = vpow.pop %v2347
    %v2349 = vmul.f32 %v2322, 1.442695
    %v2350 = vpow.pop %v2349
    %v2351 = vadd.f32 %v2324, 1.0
    %v2352 = vadd.f32 %v2326, 1.0
    %v2353 = vadd.f32 %v2328, 1.0
    %v2354 = vadd.f32 %v2330, 1.0
    %v2355 = vadd.f32 %v2332, 1.0
    %v2356 = vadd.f32 %v2334, 1.0
    %v2357 = vadd.f32 %v2336, 1.0
    %v2358 = vadd.f32 %v2338, 1.0
    %v2359 = vadd.f32 %v2340, 1.0
    %v2360 = vadd.f32 %v2342, 1.0
    %v2361 = vadd.f32 %v2344, 1.0
    %v2362 = vadd.f32 %v2346, 1.0
    %v2363 = vadd.f32 %v2348, 1.0
    %v2364 = vadd.f32 %v2350, 1.0
    %v2365 = vrcp.pop %v2351
    %v2366 = vrcp.pop %v2352
    %v2367 = vrcp.pop %v2353
    %v2368 = vrcp.pop %v2354
    %v2369 = vrcp.pop %v2355
    %v2370 = vrcp.pop %v2356
    %v2371 = vrcp.pop %v2357
    %v2372 = vrcp.pop %v2358
    %v2373 = vrcp.pop %v2359
    %v2374 = vrcp.pop %v2360
    %v2375 = vrcp.pop %v2361
    %v2376 = vrcp.pop %v2362
    %v2377 = vrcp.pop %v2363
    %v2378 = vrcp.pop %v2364
    %v2379 = vpack.c.bf16 %v2372, %v2365
    %v2380 = vpack.c.bf16 %v2373, %v2366
    %v2381 = vpack.c.bf16 %v2374, %v2367
    %v2382 = vpack.c.bf16 %v2375, %v2368
    %v2383 = vpack.c.bf16 %v2376, %v2369
    %v2384 = vpack.c.bf16 %v2377, %v2370
    %v2385 = vpack.c.bf16 %v2378, %v2371
    %v2393 = vunpack.c.l.b16 %v2379
    %v2394 = vunpack.c.l.b16 %v2380
    %v2395 = vunpack.c.l.b16 %v2381
    %v2396 = vunpack.c.l.b16 %v2382
    %v2397 = vunpack.c.l.b16 %v2383
    %v2398 = vunpack.c.l.b16 %v2384
    %v2399 = vunpack.c.l.b16 %v2385
    %v2400 = vunpack.c.h.b16 %v2379
    %v2401 = vunpack.c.h.b16 %v2380
    %v2402 = vunpack.c.h.b16 %v2381
    %v2403 = vunpack.c.h.b16 %v2382
    %v2404 = vunpack.c.h.b16 %v2383
    %v2405 = vunpack.c.h.b16 %v2384
    %v2406 = vunpack.c.h.b16 %v2385
    %v2407 = vpack.c.b16 %v2394, %v2393
    %v2408 = vpack.c.b16 %v2396, %v2395
    %v2409 = vpack.c.b16 %v2398, %v2397
    %v2410 = vpack.c.b16 %v2399, %v2399
    %v2411 = vpack.c.b16 %v2401, %v2400
    %v2412 = vpack.c.b16 %v2403, %v2402
    %v2413 = vpack.c.b16 %v2405, %v2404
    %v2414 = vpack.c.b16 %v2406, %v2406
    %2423 = vst [vmem:[%s10] sm:$0xff] %v2407
    %2424 = vst [vmem:[%s10 + $0x8] sm:$0xff] %v2408
    %2425 = vst [vmem:[%s10 + $0x10] sm:$0xff] %v2409
    %2426 = vst [vmem:[%s10 + $0x18] sm:$0xf] %v2410
    %2427 = vst [vmem:[%s10 + $0x1c] sm:$0xff] %v2411
    %2428 = vst [vmem:[%s10 + $0x24] sm:$0xff] %v2412
    %2429 = vst [vmem:[%s10 + $0x2c] sm:$0xff] %v2413
    %2430 = vst [vmem:[%s10 + $0x34] sm:$0xf] %v2414
    %2431 = vst [vmem:[%s11] sm:$0xff] %v1226
    %2432 = vst [vmem:[%s11 + $0x8] sm:$0xff] %v1228
    %2433 = vst [vmem:[%s11 + $0x10] sm:$0xff] %v1230
    %2434 = vst [vmem:[%s11 + $0x18] sm:$0xff] %v1232
    // Predicated region
    $region54: #{vae_forward.1} parent=1 // pred_check
      _
    $region55: #{vae_forward.1} parent=1 // pred_check_branch
      %2436 = sbr.rel (0) target = $region57
    $region56: #{vae_forward.1} parent=1 // pred_region
      _
    $region57: #{vae_forward.1} parent=1 // pred_fallthru
      _
    // Predicated region
    $region58: #{vae_forward.1} parent=1 // pred_check
      _
    $region59: #{vae_forward.1} parent=1 // pred_check_branch
      %2438 = sbr.rel (0) target = $region61
    $region60: #{vae_forward.1} parent=1 // pred_region
      _
    $region61: #{vae_forward.1} parent=1 // pred_fallthru
      _
    // Predicated region
    $region62: #{vae_forward.1} parent=1 // pred_check
      _
    $region63: #{vae_forward.1} parent=1 // pred_check_branch
      %2440 = sbr.rel (0) target = $region65
    $region64: #{vae_forward.1} parent=1 // pred_region
      _
    $region65: #{vae_forward.1} parent=1 // pred_fallthru
      _
    // Predicated region
    $region66: #{vae_forward.1} parent=1 // pred_check
      _
    $region67: #{vae_forward.1} parent=1 // pred_check_branch
      %2442 = sbr.rel (0) target = $region69
    $region68: #{vae_forward.1} parent=1 // pred_region
      _
    $region69: #{vae_forward.1} parent=1 // pred_fallthru
      _
    %2443 = vsyncpa [#allocation3], 1
    %2444 = vsyncpa [#allocation5], 1

</llo_original>
